<compile_context>
chip_gen: v5e
topology: v5e:2x2
jax: 0.10.0
libtpu: 0.0.40
codegen_flags: <defaults>
</compile_context>

<pallas_src>
import math

import numpy as np

import jax
import jax.numpy as jnp
from jax.experimental import pallas as pl
from jax.experimental.pallas import tpu as pltpu  # noqa: F401  (TPU backend assumed)

# ----------------------------- configuration ------------------------------
N = 2                 # batch
IN_CH = 1             # in_channels
E = 16                # num_electrodes
T = 32                # chunk_size
FS = 32               # sampling_rate
NUM_T = 16            # num_T temporal kernels
HID = 16              # hid_channels
POOL_K = 8            # pool_kernel_size
POOL_S = 4            # pool_stride
NUM_CLASSES = 2
REGION_LIST = [[0, 1, 2, 3], [4, 5, 6, 7], [8, 9, 10, 11], [12, 13, 14, 15]]
R = len(REGION_LIST)
CBAM_REDUCTION = 16   # standard CBAM default
SA_K = 7              # CBAM spatial-attention kernel size
BN_EPS = 1e-5

KERNEL_SIZES = [int(0.5 * FS), int(0.25 * FS), int(0.125 * FS)]


def conv_out_len(t, k):
    return t - k + 1


def pool_out_len(t, k, s):
    return (t - k) // s + 1


T_POOLS = [pool_out_len(conv_out_len(T, k), POOL_K, POOL_S) for k in KERNEL_SIZES]
TC = sum(T_POOLS)                    # concatenated pooled-time length (= 14)
HW = NUM_T * TC                      # flattened CBAM map (h=num_T, w=TC) -> 224
FEATURE_DIM = NUM_T * (TC // 2)      # after AvgPool2d((1,2)) + flatten -> 112
GROUP_W = 256                        # 128-aligned lane width of one pool-tap group (>= HW)
NCOL = POOL_K * GROUP_W              # Toeplitz conv output width (= 2048)


# ------------------------------ one-time host-side prep -----------------------------
def bn_fold(gamma, beta, mean, var):
    scale = gamma / np.sqrt(var + BN_EPS)
    shift = beta - mean * scale
    return scale.astype(np.float32), shift.astype(np.float32)


def aggregation_matrix():
    m = np.zeros((R, E), np.float32)
    for r, reg in enumerate(REGION_LIST):
        m[r, reg] = 1.0 / len(reg)
    return m


def build_sa_conv_matrix(w_sa):
    """Dense [2*HW, HW] matrix equivalent to the CBAM Conv2d(2,1,7,padding=3).

    Flat map index is w*NUM_T + h (w = pooled-time, h = num_T channel); row
    block 0 acts on the channel-max map, block 1 on the channel-mean map.
    """
    h, w = NUM_T, TC
    pad = SA_K // 2
    h_in = np.arange(h)
    w_in = np.arange(w)
    h_out = np.arange(h)
    w_out = np.arange(w)
    kh = h_in[None, :, None, None] - h_out[None, None, None, :] + pad
    kw = w_in[:, None, None, None] - w_out[None, None, :, None] + pad
    valid = (kh >= 0) & (kh < SA_K) & (kw >= 0) & (kw < SA_K)
    kh_c = np.clip(kh, 0, SA_K - 1)
    kw_c = np.clip(kw, 0, SA_K - 1)
    mats = []
    for ic in range(2):
        vals = w_sa[0, ic][kh_c, kw_c]                       # [w, h, w, h]
        mats.append(np.where(valid, vals, 0.0).reshape(h * w, h * w))
    return np.concatenate(mats, axis=0).astype(np.float32)


def build_pair_pool_perm():
    """[HW, FEATURE_DIM]: AvgPool2d((1,2)) over w plus the permutation to the
    PyTorch flatten(start_dim=2) order (feature = c * TC//2 + w_pooled)."""
    m = np.zeros((TC, NUM_T, NUM_T, TC // 2), np.float32)
    for w in range(TC):
        for c in range(NUM_T):
            m[w, c, c, w // 2] = 0.5
    return m.reshape(HW, FEATURE_DIM)


def build_toeplitz(params_np):
    """Toeplitz conv matrix [T, NCOL] + bias row [1, NCOL].

    Column index = j*GROUP_W + t_cat*NUM_T + c, where j is the pooling tap
    (0..POOL_K-1), t_cat the concatenated pooled-time index and c the num_T
    channel.  1/POOL_K of the avg-pool is folded in as 1/sqrt(POOL_K).
    """
    wt = np.zeros((T, NCOL), np.float32)
    cb = np.zeros((1, NCOL), np.float32)
    inv = 1.0 / math.sqrt(POOL_K)
    t_off = 0
    for bi, k in enumerate(KERNEL_SIZES):
        w = params_np[f"t{bi}_w"]                            # [NUM_T, K]
        b = params_np[f"t{bi}_b"]                            # [NUM_T]
        for p in range(T_POOLS[bi]):
            for j in range(POOL_K):
                tstep = p * POOL_S + j                       # conv time step
                for c in range(NUM_T):
                    col = j * GROUP_W + (t_off + p) * NUM_T + c
                    wt[tstep:tstep + k, col] = w[c, :] * inv
                    cb[0, col] = b[c] * inv
        t_off += T_POOLS[bi]
    return wt, cb


def prepare_params(params, n=N):
    """One-time: fold BN, build all dense constant matrices, pack small ones."""
    pr = {k: np.asarray(v) for k, v in params.items()}
    eye_n = np.eye(n, dtype=np.float32)

    # temporal Toeplitz conv + bias
    wt, cb = build_toeplitz(pr)

    # bn_t1 folded, tiled over lanes in (t_cat, c) order (c minor)
    bns, bnb = bn_fold(pr["bn_t1_gamma"], pr["bn_t1_beta"],
                       pr["bn_t1_mean"], pr["bn_t1_var"])
    tbn = np.stack([np.tile(bns, TC), np.tile(bnb, TC)], axis=0).astype(np.float32)

    # CBAM constants
    caw1 = np.kron(eye_n, pr["cbam_w1"]).astype(np.float32)          # [n*er, n*E]
    caw2 = np.kron(eye_n, pr["cbam_w2"]).astype(np.float32)          # [n*E, n*er]
    msa = build_sa_conv_matrix(pr["cbam_sa_w"])                      # [2*HW, HW]
    bsa = pr["cbam_sa_b"].reshape(1, 1).astype(np.float32)
    p2 = build_pair_pool_perm()                                      # [HW, FEATURE_DIM]

    # graph head constants
    lfw = np.tile(pr["lf_w"], (n, 1)).astype(np.float32)             # [n*E, F]
    lfb = np.tile(pr["lf_b"], (n, 1)).astype(np.float32)             # [n*E, 1]
    abig = np.kron(eye_n, aggregation_matrix()).astype(np.float32)   # [n*R, n*E]
    g2 = pr["global_adj"] + pr["global_adj"].T
    g2big = np.kron(eye_n, g2).astype(np.float32)                    # [n*R, n*R]
    eye_nr = np.eye(n * R, dtype=np.float32)

    bn1s, bn1b = bn_fold(pr["bn_g1_gamma"], pr["bn_g1_beta"],
                         pr["bn_g1_mean"], pr["bn_g1_var"])
    bn2s, bn2b = bn_fold(pr["bn_g2_gamma"], pr["bn_g2_beta"],
                         pr["bn_g2_mean"], pr["bn_g2_var"])
    gcn_w = pr["gcn_w"].astype(np.float32)                           # [F, HID]
    gsum = gcn_w.sum(axis=0)                                         # [HID]
    # bn_g1 folded into the re-associated GCN:  xw = bn1s*(xa@W) + bn1b*sum(W)
    bn1s_col = np.tile(bn1s.reshape(R, 1), (n, 1)).astype(np.float32)          # [nR,1]
    bn1g = np.tile(bn1b.reshape(R, 1) * gsum.reshape(1, HID), (n, 1)).astype(np.float32)

    # bn_g2 + flatten + fc folded into Wcat / mask / row-sum / col-select
    fc_w = pr["fc_w"]                                                # [C, R*HID]
    fc_b = pr["fc_b"]                                                # [C]
    wcat = np.zeros((HID, R * NUM_CLASSES), np.float32)
    for r in range(R):
        for c in range(NUM_CLASSES):
            wcat[:, r * NUM_CLASSES + c] = bn2s[r] * fc_w[c, r * HID:(r + 1) * HID]
    mmask = np.zeros((n * R, R * NUM_CLASSES), np.float32)
    for i in range(n):
        for r in range(R):
            mmask[i * R + r, r * NUM_CLASSES:(r + 1) * NUM_CLASSES] = 1.0
    srow = np.kron(eye_n, np.ones((1, R), np.float32)).astype(np.float32)       # [n, nR]
    scol = np.tile(np.eye(NUM_CLASSES, dtype=np.float32), (R, 1))               # [R*C, C]
    fcb2 = np.array(
        [fc_b[c] + float(np.dot(bn2b, fc_w[c].reshape(R, HID).sum(axis=1)))
         for c in range(NUM_CLASSES)], np.float32).reshape(1, NUM_CLASSES)

    # ---- pack all small constants into a single slab (8-aligned row blocks) ----
    entries = [
        ("caw1", caw1), ("caw2", caw2), ("lfw", lfw), ("lfb", lfb),
        ("abig", abig), ("g2big", g2big), ("eye", eye_nr),
        ("bn1s", bn1s_col), ("bn1g", bn1g), ("wcat", wcat),
        ("mmask", mmask), ("srow", srow), ("scol", scol),
        ("fcb2", fcb2), ("bsa", bsa),
    ]
    slab_w = max(a.shape[1] for _, a in entries)
    offs = {}
    rows = 0
    for name, a in entries:
        offs[name] = (rows, a.shape[0], a.shape[1])
        rows += ((a.shape[0] + 7) // 8) * 8
    slab = np.zeros((rows, slab_w), np.float32)
    for name, a in entries:
        r0, h, w = offs[name]
        slab[r0:r0 + h, :w] = a

    consts = dict(
        wt=jnp.asarray(wt), cb=jnp.asarray(cb), tbn=jnp.asarray(tbn),
        slab=jnp.asarray(slab), msa=jnp.asarray(msa), p2=jnp.asarray(p2),
        gcn=jnp.asarray(gcn_w),
    )
    return consts, offs


# ------------------------------ fused Pallas kernel + wrapper -----------------------
def make_forward(offs, n=N):
    ne = n * E

    def kernel(xs_ref, wt_ref, cb_ref, tbn_ref, slab_ref, msa_ref, p2_ref, gcn_ref,
               out_ref):
        """Entire LGGNet forward for the whole (tiny) batch, VMEM resident."""

        def cst(name):
            r0, h, w = offs[name]
            return slab_ref[r0:r0 + h, 0:w]

        # ---- dynamic temporal layer: Toeplitz conv -> square -> windowed sum ----
        conv = jnp.dot(xs_ref[...], wt_ref[...],
                       preferred_element_type=jnp.float32) + cb_ref[...]   # [ne, NCOL]
        sq = conv * conv
        pooled = sq[:, 0:HW]
        for j in range(1, POOL_K):
            pooled = pooled + sq[:, j * GROUP_W:j * GROUP_W + HW]
        # TODO(synk): log(0) -> -inf for an all-zero pooling window (matches torch).
        y = jnp.log(pooled) * tbn_ref[0:1, :] + tbn_ref[1:2, :]            # [ne, HW]

        # ---- CBAM channel attention (shared SE MLP on max/avg pooled maps) ----
        mx = jnp.max(y, axis=-1, keepdims=True)                            # [ne, 1]
        av = jnp.mean(y, axis=-1, keepdims=True)                           # [ne, 1]
        cols = jnp.concatenate([mx, av], axis=-1)                          # [ne, 2]
        hidden = jnp.maximum(
            jnp.dot(cst("caw1"), cols, preferred_element_type=jnp.float32), 0.0)
        se = jnp.dot(cst("caw2"), hidden, preferred_element_type=jnp.float32)
        ca = jax.nn.sigmoid(se[:, 0:1] + se[:, 1:2])                       # [ne, 1]
        out1 = y * ca                                                      # [ne, HW]

        # ---- CBAM spatial attention (7x7 conv as two dense matmuls) + residual ----
        mx_rows, av_rows = [], []
        for i in range(n):                                                 # n is tiny & static
            blk = out1[i * E:(i + 1) * E, :]
            mx_rows.append(jnp.max(blk, axis=0, keepdims=True))
            av_rows.append(jnp.mean(blk, axis=0, keepdims=True))
        mxp = jnp.concatenate(mx_rows, axis=0)                             # [n, HW]
        avp = jnp.concatenate(av_rows, axis=0)                             # [n, HW]
        sa = jax.nn.sigmoid(
            jnp.dot(mxp, msa_ref[0:HW, :], preferred_element_type=jnp.float32)
            + jnp.dot(avp, msa_ref[HW:2 * HW, :], preferred_element_type=jnp.float32)
            + cst("bsa"))                                                  # [n, HW]
        fin_rows = []
        for i in range(n):
            fin_rows.append(out1[i * E:(i + 1) * E, :] * sa[i:i + 1, :]
                            + y[i * E:(i + 1) * E, :])                     # CBAM residual
        final = jnp.concatenate(fin_rows, axis=0)                          # [ne, HW]

        # ---- AvgPool2d((1,2)) + flatten -> local filter -> aggregate ----
        feat = jnp.dot(final, p2_ref[...],
                       preferred_element_type=jnp.float32)                 # [ne, F]
        xloc = jnp.maximum(feat * cst("lfw") - cst("lfb"), 0.0)
        xa = jnp.dot(cst("abig"), xloc, preferred_element_type=jnp.float32)  # [nR, F]

        # ---- get_adj (block-diagonal over samples) ----
        s = jax.lax.dot_general(xa, xa, (((1,), (1,)), ((), ())),
                                preferred_element_type=jnp.float32)        # xa @ xa.T
        adj = jnp.maximum(s * cst("g2big"), 0.0) + cst("eye")              # relu + self loops
        rowsum = jnp.sum(adj, axis=1, keepdims=True)
        rowsum = rowsum + jnp.where(rowsum == 0.0, 1.0, 0.0)
        colsum = jnp.sum(adj, axis=0, keepdims=True)                       # == rowsum.T (symm.)
        colsum = colsum + jnp.where(colsum == 0.0, 1.0, 0.0)
        adj = jax.lax.rsqrt(rowsum) * adj * jax.lax.rsqrt(colsum)

        # ---- bn_g1 (folded) -> GCN (re-associated) -> bn_g2 + fc (folded) ----
        xaw = jnp.dot(xa, gcn_ref[...], preferred_element_type=jnp.float32)  # [nR, HID]
        xw = xaw * cst("bn1s") + cst("bn1g")
        h1 = jnp.dot(adj, xw, preferred_element_type=jnp.float32)            # [nR, HID]
        z = jnp.dot(h1, cst("wcat"), preferred_element_type=jnp.float32)     # [nR, R*C]
        zm = z * cst("mmask")
        logits = jnp.dot(
            jnp.dot(cst("srow"), zm, preferred_element_type=jnp.float32),
            cst("scol"), preferred_element_type=jnp.float32) + cst("fcb2")   # [n, C]
        out_ref[...] = logits

    call = pl.pallas_call(
        kernel,
        out_shape=jax.ShapeDtypeStruct((n, NUM_CLASSES), jnp.float32),
    )

    def forward(consts, x):
        xs = x[:, 0, :, :].reshape(ne, T)                   # only x-dependent wrapper op
        return call(xs, consts["wt"], consts["cb"], consts["tbn"], consts["slab"],
                    consts["msa"], consts["p2"], consts["gcn"])

    return jax.jit(forward)


# ------------------------------ parameters ---------------------------------------
def _xavier_normal(key, shape, fan_in, fan_out):
    std = math.sqrt(2.0 / (fan_in + fan_out))
    return std * jax.random.normal(key, shape, dtype=jnp.float32)


def _xavier_uniform(key, shape, fan_in, fan_out):
    a = math.sqrt(6.0 / (fan_in + fan_out))
    return jax.random.uniform(key, shape, dtype=jnp.float32, minval=-a, maxval=a)


def init_params(key):
    keys = jax.random.split(key, 16)
    er = max(E // CBAM_REDUCTION, 1)
    p = {}
    for i, k in enumerate(KERNEL_SIZES):
        p[f"t{i}_w"] = _xavier_uniform(keys[i], (NUM_T, k), k, NUM_T)
        p[f"t{i}_b"] = 0.01 * jax.random.normal(keys[3 + i], (NUM_T,), jnp.float32)
    p["bn_t1_gamma"] = jnp.ones((NUM_T,), jnp.float32)
    p["bn_t1_beta"] = jnp.zeros((NUM_T,), jnp.float32)
    p["bn_t1_mean"] = jnp.zeros((NUM_T,), jnp.float32)
    p["bn_t1_var"] = jnp.ones((NUM_T,), jnp.float32)
    p["cbam_w1"] = _xavier_uniform(keys[6], (er, E), E, er)
    p["cbam_w2"] = _xavier_uniform(keys[7], (E, er), er, E)
    p["cbam_sa_w"] = _xavier_uniform(keys[8], (1, 2, SA_K, SA_K), 2 * SA_K * SA_K, 1)
    p["cbam_sa_b"] = jnp.zeros((1,), jnp.float32)
    p["lf_w"] = _xavier_uniform(keys[9], (E, FEATURE_DIM), E, FEATURE_DIM)
    p["lf_b"] = jnp.zeros((E, 1), jnp.float32)
    p["global_adj"] = _xavier_uniform(keys[10], (R, R), R, R)
    for name in ("bn_g1", "bn_g2"):
        p[f"{name}_gamma"] = jnp.ones((R,), jnp.float32)
        p[f"{name}_beta"] = jnp.zeros((R,), jnp.float32)
        p[f"{name}_mean"] = jnp.zeros((R,), jnp.float32)
        p[f"{name}_var"] = jnp.ones((R,), jnp.float32)
    p["gcn_w"] = _xavier_normal(keys[11], (FEATURE_DIM, HID), FEATURE_DIM, HID)
    p["fc_w"] = _xavier_uniform(keys[12], (NUM_CLASSES, R * HID), R * HID, NUM_CLASSES)
    p["fc_b"] = jnp.zeros((NUM_CLASSES,), jnp.float32)
    return p


# ------------------------------ main ----------------------------------------------
if __name__ == "__main__":
    key = jax.random.PRNGKey(0)
    pkey, xkey = jax.random.split(key)
    params = init_params(pkey)
    x = jax.random.normal(xkey, (N, IN_CH, E, T), dtype=jnp.float32)

    consts, offs = prepare_params(params)       # one-time, off the hot path
    forward = make_forward(offs)

    out = forward(consts, x)
    out = jax.block_until_ready(out)
    assert out.shape == (N, NUM_CLASSES)
    assert bool(jnp.all(jnp.isfinite(out)))
    print("KERNEL_OK")
</pallas_src>

<mosaic_0001>
module attributes {stable_mosaic.version = 11 : i64} {
  func.func @kernel(%arg0: memref<32x32xf32, #tpu.memory_space<vmem>>, %arg1: memref<32x2048xf32, #tpu.memory_space<vmem>>, %arg2: memref<1x2048xf32, #tpu.memory_space<vmem>>, %arg3: memref<2x224xf32, #tpu.memory_space<vmem>>, %arg4: memref<200x112xf32, #tpu.memory_space<vmem>>, %arg5: memref<448x224xf32, #tpu.memory_space<vmem>>, %arg6: memref<224x112xf32, #tpu.memory_space<vmem>>, %arg7: memref<112x16xf32, #tpu.memory_space<vmem>>, %arg8: memref<2x2xf32, #tpu.memory_space<vmem>>) attributes {dimension_semantics = [], scalar_prefetch = 0 : i64, scratch_operands = 0 : i64, tpu.core_type = #tpu.core_type<tc>} {
    %c0 = arith.constant 0 : index
    %c0_0 = arith.constant 0 : index
    %0 = vector.load %arg0[%c0, %c0_0] : memref<32x32xf32, #tpu.memory_space<vmem>>, vector<32x32xf32>
    %c0_1 = arith.constant 0 : index
    %c0_2 = arith.constant 0 : index
    %1 = vector.load %arg1[%c0_1, %c0_2] : memref<32x2048xf32, #tpu.memory_space<vmem>>, vector<32x2048xf32>
    %cst = arith.constant dense<0.000000e+00> : vector<32x2048xf32>
    %2 = tpu.matmul %0, %1, %cst {dimension_numbers = #tpu.dot_dimension_numbers<[1], [0], [0], [1], [0, 0, 1, 1], [], []>} : vector<32x32xf32>, vector<32x2048xf32>, vector<32x2048xf32> -> vector<32x2048xf32>
    %c0_3 = arith.constant 0 : index
    %c0_4 = arith.constant 0 : index
    %3 = vector.load %arg2[%c0_3, %c0_4] : memref<1x2048xf32, #tpu.memory_space<vmem>>, vector<1x2048xf32>
    %4 = vector.broadcast %3 : vector<1x2048xf32> to vector<32x2048xf32>
    %5 = arith.addf %2, %4 : vector<32x2048xf32>
    %6 = arith.mulf %5, %5 : vector<32x2048xf32>
    %7 = vector.extract_strided_slice %6 {offsets = [0, 0], sizes = [32, 224], strides = [1, 1]} : vector<32x2048xf32> to vector<32x224xf32>
    %8 = vector.extract_strided_slice %6 {offsets = [0, 256], sizes = [32, 224], strides = [1, 1]} : vector<32x2048xf32> to vector<32x224xf32>
    %9 = arith.addf %7, %8 : vector<32x224xf32>
    %10 = vector.extract_strided_slice %6 {offsets = [0, 512], sizes = [32, 224], strides = [1, 1]} : vector<32x2048xf32> to vector<32x224xf32>
    %11 = arith.addf %9, %10 : vector<32x224xf32>
    %12 = vector.extract_strided_slice %6 {offsets = [0, 768], sizes = [32, 224], strides = [1, 1]} : vector<32x2048xf32> to vector<32x224xf32>
    %13 = arith.addf %11, %12 : vector<32x224xf32>
    %14 = vector.extract_strided_slice %6 {offsets = [0, 1024], sizes = [32, 224], strides = [1, 1]} : vector<32x2048xf32> to vector<32x224xf32>
    %15 = arith.addf %13, %14 : vector<32x224xf32>
    %16 = vector.extract_strided_slice %6 {offsets = [0, 1280], sizes = [32, 224], strides = [1, 1]} : vector<32x2048xf32> to vector<32x224xf32>
    %17 = arith.addf %15, %16 : vector<32x224xf32>
    %18 = vector.extract_strided_slice %6 {offsets = [0, 1536], sizes = [32, 224], strides = [1, 1]} : vector<32x2048xf32> to vector<32x224xf32>
    %19 = arith.addf %17, %18 : vector<32x224xf32>
    %20 = vector.extract_strided_slice %6 {offsets = [0, 1792], sizes = [32, 224], strides = [1, 1]} : vector<32x2048xf32> to vector<32x224xf32>
    %21 = arith.addf %19, %20 : vector<32x224xf32>
    %22 = math.log %21 : vector<32x224xf32>
    %c0_5 = arith.constant 0 : index
    %c0_6 = arith.constant 0 : index
    %23 = vector.load %arg3[%c0_5, %c0_6] : memref<2x224xf32, #tpu.memory_space<vmem>>, vector<1x224xf32>
    %24 = vector.broadcast %23 : vector<1x224xf32> to vector<32x224xf32>
    %25 = arith.mulf %22, %24 : vector<32x224xf32>
    %c1 = arith.constant 1 : index
    %c0_7 = arith.constant 0 : index
    %26 = vector.load %arg3[%c1, %c0_7] : memref<2x224xf32, #tpu.memory_space<vmem>>, vector<1x224xf32>
    %27 = vector.broadcast %26 : vector<1x224xf32> to vector<32x224xf32>
    %28 = arith.addf %25, %27 : vector<32x224xf32>
    %cst_8 = arith.constant dense<0xFF800000> : vector<32xf32>
    %29 = vector.multi_reduction <maximumf>, %28, %cst_8 [1] : vector<32x224xf32> to vector<32xf32>
    %30 = vector.shape_cast %29 : vector<32xf32> to vector<32x1xf32>
    %cst_9 = arith.constant dense<0.000000e+00> : vector<32xf32>
    %31 = vector.multi_reduction <add>, %28, %cst_9 [1] : vector<32x224xf32> to vector<32xf32>
    %32 = vector.shape_cast %31 : vector<32xf32> to vector<32x1xf32>
    %cst_10 = arith.constant 2.240000e+02 : f32
    %33 = vector.broadcast %cst_10 : f32 to vector<32x1xf32>
    %34 = arith.divf %32, %33 : vector<32x1xf32>
    %35 = tpu.concatenate %30, %34 in 1 : vector<32x1xf32>, vector<32x1xf32> -> vector<32x2xf32>
    %c0_11 = arith.constant 0 : index
    %c0_12 = arith.constant 0 : index
    %36 = vector.load %arg4[%c0_11, %c0_12] : memref<200x112xf32, #tpu.memory_space<vmem>>, vector<2x32xf32>
    %cst_13 = arith.constant dense<0.000000e+00> : vector<2x2xf32>
    %37 = tpu.matmul %36, %35, %cst_13 {dimension_numbers = #tpu.dot_dimension_numbers<[1], [0], [0], [1], [0, 0, 1, 1], [], []>} : vector<2x32xf32>, vector<32x2xf32>, vector<2x2xf32> -> vector<2x2xf32>
    %cst_14 = arith.constant 0.000000e+00 : f32
    %38 = vector.broadcast %cst_14 : f32 to vector<2x2xf32>
    %39 = arith.maximumf %37, %38 : vector<2x2xf32>
    %c8 = arith.constant 8 : index
    %c0_15 = arith.constant 0 : index
    %40 = vector.load %arg4[%c8, %c0_15] : memref<200x112xf32, #tpu.memory_space<vmem>>, vector<32x2xf32>
    %cst_16 = arith.constant dense<0.000000e+00> : vector<32x2xf32>
    %41 = tpu.matmul %40, %39, %cst_16 {dimension_numbers = #tpu.dot_dimension_numbers<[1], [0], [0], [1], [0, 0, 1, 1], [], []>} : vector<32x2xf32>, vector<2x2xf32>, vector<32x2xf32> -> vector<32x2xf32>
    %42 = vector.extract_strided_slice %41 {offsets = [0, 0], sizes = [32, 1], strides = [1, 1]} : vector<32x2xf32> to vector<32x1xf32>
    %43 = vector.extract_strided_slice %41 {offsets = [0, 1], sizes = [32, 1], strides = [1, 1]} : vector<32x2xf32> to vector<32x1xf32>
    %44 = arith.addf %42, %43 : vector<32x1xf32>
    %45 = arith.negf %44 : vector<32x1xf32>
    %46 = math.exp %45 : vector<32x1xf32>
    %cst_17 = arith.constant 1.000000e+00 : f32
    %47 = vector.broadcast %cst_17 : f32 to vector<32x1xf32>
    %48 = arith.addf %47, %46 : vector<32x1xf32>
    %49 = arith.divf %47, %48 : vector<32x1xf32>
    %50 = vector.broadcast %49 : vector<32x1xf32> to vector<32x224xf32>
    %51 = arith.mulf %28, %50 : vector<32x224xf32>
    %52 = vector.extract_strided_slice %51 {offsets = [0, 0], sizes = [16, 224], strides = [1, 1]} : vector<32x224xf32> to vector<16x224xf32>
    %cst_18 = arith.constant dense<0xFF800000> : vector<224xf32>
    %53 = vector.multi_reduction <maximumf>, %52, %cst_18 [0] : vector<16x224xf32> to vector<224xf32>
    %54 = vector.shape_cast %53 : vector<224xf32> to vector<1x224xf32>
    %cst_19 = arith.constant dense<0.000000e+00> : vector<224xf32>
    %55 = vector.multi_reduction <add>, %52, %cst_19 [0] : vector<16x224xf32> to vector<224xf32>
    %56 = vector.shape_cast %55 : vector<224xf32> to vector<1x224xf32>
    %cst_20 = arith.constant 1.600000e+01 : f32
    %57 = vector.broadcast %cst_20 : f32 to vector<1x224xf32>
    %58 = arith.divf %56, %57 : vector<1x224xf32>
    %59 = vector.extract_strided_slice %51 {offsets = [16, 0], sizes = [16, 224], strides = [1, 1]} : vector<32x224xf32> to vector<16x224xf32>
    %cst_21 = arith.constant dense<0xFF800000> : vector<224xf32>
    %60 = vector.multi_reduction <maximumf>, %59, %cst_21 [0] : vector<16x224xf32> to vector<224xf32>
    %61 = vector.shape_cast %60 : vector<224xf32> to vector<1x224xf32>
    %cst_22 = arith.constant dense<0.000000e+00> : vector<224xf32>
    %62 = vector.multi_reduction <add>, %59, %cst_22 [0] : vector<16x224xf32> to vector<224xf32>
    %63 = vector.shape_cast %62 : vector<224xf32> to vector<1x224xf32>
    %cst_23 = arith.constant 1.600000e+01 : f32
    %64 = vector.broadcast %cst_23 : f32 to vector<1x224xf32>
    %65 = arith.divf %63, %64 : vector<1x224xf32>
    %66 = tpu.concatenate %54, %61 in 0 : vector<1x224xf32>, vector<1x224xf32> -> vector<2x224xf32>
    %67 = tpu.concatenate %58, %65 in 0 : vector<1x224xf32>, vector<1x224xf32> -> vector<2x224xf32>
    %c0_24 = arith.constant 0 : index
    %c0_25 = arith.constant 0 : index
    %68 = vector.load %arg5[%c0_24, %c0_25] : memref<448x224xf32, #tpu.memory_space<vmem>>, vector<224x224xf32>
    %cst_26 = arith.constant dense<0.000000e+00> : vector<2x224xf32>
    %69 = tpu.matmul %66, %68, %cst_26 {dimension_numbers = #tpu.dot_dimension_numbers<[1], [0], [0], [1], [0, 0, 1, 1], [], []>} : vector<2x224xf32>, vector<224x224xf32>, vector<2x224xf32> -> vector<2x224xf32>
    %c224 = arith.constant 224 : index
    %c0_27 = arith.constant 0 : index
    %70 = vector.load %arg5[%c224, %c0_27] : memref<448x224xf32, #tpu.memory_space<vmem>>, vector<224x224xf32>
    %cst_28 = arith.constant dense<0.000000e+00> : vector<2x224xf32>
    %71 = tpu.matmul %67, %70, %cst_28 {dimension_numbers = #tpu.dot_dimension_numbers<[1], [0], [0], [1], [0, 0, 1, 1], [], []>} : vector<2x224xf32>, vector<224x224xf32>, vector<2x224xf32> -> vector<2x224xf32>
    %72 = arith.addf %69, %71 : vector<2x224xf32>
    %c192 = arith.constant 192 : index
    %c0_29 = arith.constant 0 : index
    %73 = vector.load %arg4[%c192, %c0_29] : memref<200x112xf32, #tpu.memory_space<vmem>>, vector<1x1xf32>
    %74 = vector.broadcast %73 : vector<1x1xf32> to vector<2x224xf32>
    %75 = arith.addf %72, %74 : vector<2x224xf32>
    %76 = arith.negf %75 : vector<2x224xf32>
    %77 = math.exp %76 : vector<2x224xf32>
    %cst_30 = arith.constant 1.000000e+00 : f32
    %78 = vector.broadcast %cst_30 : f32 to vector<2x224xf32>
    %79 = arith.addf %78, %77 : vector<2x224xf32>
    %80 = arith.divf %78, %79 : vector<2x224xf32>
    %81 = vector.extract_strided_slice %51 {offsets = [0, 0], sizes = [16, 224], strides = [1, 1]} : vector<32x224xf32> to vector<16x224xf32>
    %82 = vector.extract_strided_slice %80 {offsets = [0, 0], sizes = [1, 224], strides = [1, 1]} : vector<2x224xf32> to vector<1x224xf32>
    %83 = vector.broadcast %82 : vector<1x224xf32> to vector<16x224xf32>
    %84 = arith.mulf %81, %83 : vector<16x224xf32>
    %85 = vector.extract_strided_slice %28 {offsets = [0, 0], sizes = [16, 224], strides = [1, 1]} : vector<32x224xf32> to vector<16x224xf32>
    %86 = arith.addf %84, %85 : vector<16x224xf32>
    %87 = vector.extract_strided_slice %51 {offsets = [16, 0], sizes = [16, 224], strides = [1, 1]} : vector<32x224xf32> to vector<16x224xf32>
    %88 = vector.extract_strided_slice %80 {offsets = [1, 0], sizes = [1, 224], strides = [1, 1]} : vector<2x224xf32> to vector<1x224xf32>
    %89 = vector.broadcast %88 : vector<1x224xf32> to vector<16x224xf32>
    %90 = arith.mulf %87, %89 : vector<16x224xf32>
    %91 = vector.extract_strided_slice %28 {offsets = [16, 0], sizes = [16, 224], strides = [1, 1]} : vector<32x224xf32> to vector<16x224xf32>
    %92 = arith.addf %90, %91 : vector<16x224xf32>
    %93 = tpu.concatenate %86, %92 in 0 : vector<16x224xf32>, vector<16x224xf32> -> vector<32x224xf32>
    %c0_31 = arith.constant 0 : index
    %c0_32 = arith.constant 0 : index
    %94 = vector.load %arg6[%c0_31, %c0_32] : memref<224x112xf32, #tpu.memory_space<vmem>>, vector<224x112xf32>
    %cst_33 = arith.constant dense<0.000000e+00> : vector<32x112xf32>
    %95 = tpu.matmul %93, %94, %cst_33 {dimension_numbers = #tpu.dot_dimension_numbers<[1], [0], [0], [1], [0, 0, 1, 1], [], []>} : vector<32x224xf32>, vector<224x112xf32>, vector<32x112xf32> -> vector<32x112xf32>
    %c40 = arith.constant 40 : index
    %c0_34 = arith.constant 0 : index
    %96 = vector.load %arg4[%c40, %c0_34] : memref<200x112xf32, #tpu.memory_space<vmem>>, vector<32x112xf32>
    %97 = arith.mulf %95, %96 : vector<32x112xf32>
    %c72 = arith.constant 72 : index
    %c0_35 = arith.constant 0 : index
    %98 = vector.load %arg4[%c72, %c0_35] : memref<200x112xf32, #tpu.memory_space<vmem>>, vector<32x1xf32>
    %99 = vector.broadcast %98 : vector<32x1xf32> to vector<32x112xf32>
    %100 = arith.subf %97, %99 : vector<32x112xf32>
    %cst_36 = arith.constant 0.000000e+00 : f32
    %101 = vector.broadcast %cst_36 : f32 to vector<32x112xf32>
    %102 = arith.maximumf %100, %101 : vector<32x112xf32>
    %c104 = arith.constant 104 : index
    %c0_37 = arith.constant 0 : index
    %103 = vector.load %arg4[%c104, %c0_37] : memref<200x112xf32, #tpu.memory_space<vmem>>, vector<8x32xf32>
    %cst_38 = arith.constant dense<0.000000e+00> : vector<8x112xf32>
    %104 = tpu.matmul %103, %102, %cst_38 {dimension_numbers = #tpu.dot_dimension_numbers<[1], [0], [0], [1], [0, 0, 1, 1], [], []>} : vector<8x32xf32>, vector<32x112xf32>, vector<8x112xf32> -> vector<8x112xf32>
    %cst_39 = arith.constant dense<0.000000e+00> : vector<8x8xf32>
    %105 = tpu.matmul %104, %104, %cst_39 {dimension_numbers = #tpu.dot_dimension_numbers<[1], [1], [0], [0], [0, 0, 1, 0], [], []>} : vector<8x112xf32>, vector<8x112xf32>, vector<8x8xf32> -> vector<8x8xf32>
    %c112 = arith.constant 112 : index
    %c0_40 = arith.constant 0 : index
    %106 = vector.load %arg4[%c112, %c0_40] : memref<200x112xf32, #tpu.memory_space<vmem>>, vector<8x8xf32>
    %107 = arith.mulf %105, %106 : vector<8x8xf32>
    %cst_41 = arith.constant 0.000000e+00 : f32
    %108 = vector.broadcast %cst_41 : f32 to vector<8x8xf32>
    %109 = arith.maximumf %107, %108 : vector<8x8xf32>
    %c120 = arith.constant 120 : index
    %c0_42 = arith.constant 0 : index
    %110 = vector.load %arg4[%c120, %c0_42] : memref<200x112xf32, #tpu.memory_space<vmem>>, vector<8x8xf32>
    %111 = arith.addf %109, %110 : vector<8x8xf32>
    %cst_43 = arith.constant dense<0.000000e+00> : vector<8xf32>
    %112 = vector.multi_reduction <add>, %111, %cst_43 [1] : vector<8x8xf32> to vector<8xf32>
    %113 = vector.shape_cast %112 : vector<8xf32> to vector<8x1xf32>
    %cst_44 = arith.constant 0.000000e+00 : f32
    %114 = vector.broadcast %cst_44 : f32 to vector<8x1xf32>
    %115 = arith.cmpf oeq, %113, %114 : vector<8x1xf32>
    %cst_45 = arith.constant 1.000000e+00 : f32
    %cst_46 = arith.constant 0.000000e+00 : f32
    %116 = vector.broadcast %cst_45 : f32 to vector<8x1xf32>
    %117 = vector.broadcast %cst_46 : f32 to vector<8x1xf32>
    %118 = arith.select %115, %116, %117 : vector<8x1xi1>, vector<8x1xf32>
    %119 = arith.addf %113, %118 : vector<8x1xf32>
    %cst_47 = arith.constant dense<0.000000e+00> : vector<8xf32>
    %120 = vector.multi_reduction <add>, %111, %cst_47 [0] : vector<8x8xf32> to vector<8xf32>
    %121 = vector.shape_cast %120 : vector<8xf32> to vector<1x8xf32>
    %cst_48 = arith.constant 0.000000e+00 : f32
    %122 = vector.broadcast %cst_48 : f32 to vector<1x8xf32>
    %123 = arith.cmpf oeq, %121, %122 : vector<1x8xf32>
    %cst_49 = arith.constant 1.000000e+00 : f32
    %cst_50 = arith.constant 0.000000e+00 : f32
    %124 = vector.broadcast %cst_49 : f32 to vector<1x8xf32>
    %125 = vector.broadcast %cst_50 : f32 to vector<1x8xf32>
    %126 = arith.select %123, %124, %125 : vector<1x8xi1>, vector<1x8xf32>
    %127 = arith.addf %121, %126 : vector<1x8xf32>
    %128 = math.rsqrt %119 : vector<8x1xf32>
    %129 = vector.broadcast %128 : vector<8x1xf32> to vector<8x8xf32>
    %130 = arith.mulf %129, %111 : vector<8x8xf32>
    %131 = math.rsqrt %127 : vector<1x8xf32>
    %132 = vector.broadcast %131 : vector<1x8xf32> to vector<8x8xf32>
    %133 = arith.mulf %130, %132 : vector<8x8xf32>
    %c0_51 = arith.constant 0 : index
    %c0_52 = arith.constant 0 : index
    %134 = vector.load %arg7[%c0_51, %c0_52] : memref<112x16xf32, #tpu.memory_space<vmem>>, vector<112x16xf32>
    %cst_53 = arith.constant dense<0.000000e+00> : vector<8x16xf32>
    %135 = tpu.matmul %104, %134, %cst_53 {dimension_numbers = #tpu.dot_dimension_numbers<[1], [0], [0], [1], [0, 0, 1, 1], [], []>} : vector<8x112xf32>, vector<112x16xf32>, vector<8x16xf32> -> vector<8x16xf32>
    %c128 = arith.constant 128 : index
    %c0_54 = arith.constant 0 : index
    %136 = vector.load %arg4[%c128, %c0_54] : memref<200x112xf32, #tpu.memory_space<vmem>>, vector<8x1xf32>
    %137 = vector.broadcast %136 : vector<8x1xf32> to vector<8x16xf32>
    %138 = arith.mulf %135, %137 : vector<8x16xf32>
    %c136 = arith.constant 136 : index
    %c0_55 = arith.constant 0 : index
    %139 = vector.load %arg4[%c136, %c0_55] : memref<200x112xf32, #tpu.memory_space<vmem>>, vector<8x16xf32>
    %140 = arith.addf %138, %139 : vector<8x16xf32>
    %cst_56 = arith.constant dense<0.000000e+00> : vector<8x16xf32>
    %141 = tpu.matmul %133, %140, %cst_56 {dimension_numbers = #tpu.dot_dimension_numbers<[1], [0], [0], [1], [0, 0, 1, 1], [], []>} : vector<8x8xf32>, vector<8x16xf32>, vector<8x16xf32> -> vector<8x16xf32>
    %c144 = arith.constant 144 : index
    %c0_57 = arith.constant 0 : index
    %142 = vector.load %arg4[%c144, %c0_57] : memref<200x112xf32, #tpu.memory_space<vmem>>, vector<16x8xf32>
    %cst_58 = arith.constant dense<0.000000e+00> : vector<8x8xf32>
    %143 = tpu.matmul %141, %142, %cst_58 {dimension_numbers = #tpu.dot_dimension_numbers<[1], [0], [0], [1], [0, 0, 1, 1], [], []>} : vector<8x16xf32>, vector<16x8xf32>, vector<8x8xf32> -> vector<8x8xf32>
    %c160 = arith.constant 160 : index
    %c0_59 = arith.constant 0 : index
    %144 = vector.load %arg4[%c160, %c0_59] : memref<200x112xf32, #tpu.memory_space<vmem>>, vector<8x8xf32>
    %145 = arith.mulf %143, %144 : vector<8x8xf32>
    %c168 = arith.constant 168 : index
    %c0_60 = arith.constant 0 : index
    %146 = vector.load %arg4[%c168, %c0_60] : memref<200x112xf32, #tpu.memory_space<vmem>>, vector<2x8xf32>
    %cst_61 = arith.constant dense<0.000000e+00> : vector<2x8xf32>
    %147 = tpu.matmul %146, %145, %cst_61 {dimension_numbers = #tpu.dot_dimension_numbers<[1], [0], [0], [1], [0, 0, 1, 1], [], []>} : vector<2x8xf32>, vector<8x8xf32>, vector<2x8xf32> -> vector<2x8xf32>
    %c176 = arith.constant 176 : index
    %c0_62 = arith.constant 0 : index
    %148 = vector.load %arg4[%c176, %c0_62] : memref<200x112xf32, #tpu.memory_space<vmem>>, vector<8x2xf32>
    %cst_63 = arith.constant dense<0.000000e+00> : vector<2x2xf32>
    %149 = tpu.matmul %147, %148, %cst_63 {dimension_numbers = #tpu.dot_dimension_numbers<[1], [0], [0], [1], [0, 0, 1, 1], [], []>} : vector<2x8xf32>, vector<8x2xf32>, vector<2x2xf32> -> vector<2x2xf32>
    %c184 = arith.constant 184 : index
    %c0_64 = arith.constant 0 : index
    %150 = vector.load %arg4[%c184, %c0_64] : memref<200x112xf32, #tpu.memory_space<vmem>>, vector<1x2xf32>
    %151 = vector.broadcast %150 : vector<1x2xf32> to vector<2x2xf32>
    %152 = arith.addf %149, %151 : vector<2x2xf32>
    %c0_65 = arith.constant 0 : index
    %c0_66 = arith.constant 0 : index
    %153 = vector.load %arg8[%c0_65, %c0_66] : memref<2x2xf32, #tpu.memory_space<vmem>>, vector<2x2xf32>
    tpu.vector_store %arg8[%c0_65, %c0_66], %152 {strides = array<i32>} : memref<2x2xf32, #tpu.memory_space<vmem>>, vector<2x2xf32>,
    return
  }
}

</mosaic_0001>

<llo_original>
// kernel: forward.1
$region0: #{forward.1}
  #allocation0 [shape = 'u32[]', space=smem, size = 0x4, offset = 0x4, fixed_abs, tag = 'smem constant byte address 0x4 - core index']
  #allocation1 [shape = 'u32[72,128]{1,0:T(1,128)}', space=vmem, size = 0x9000, scoped, tag = 'internal scratch']
  %s0 = inlined_call_operand.vmem [shape: f32[32,32], index: 0, kind: input, shape index: {}]
  %s1 = inlined_call_operand.hbm [shape: f32[32,2048], index: 1, kind: input, shape index: {}]
  %s2 = inlined_call_operand.vmem [shape: f32[1,2048], index: 2, kind: input, shape index: {}]
  %s3 = inlined_call_operand.vmem [shape: f32[2,224], index: 3, kind: input, shape index: {}]
  %s4 = inlined_call_operand.hbm [shape: f32[200,112], index: 4, kind: input, shape index: {}]
  %s5 = inlined_call_operand.hbm [shape: f32[448,224], index: 5, kind: input, shape index: {}]
  %s6 = inlined_call_operand.hbm [shape: f32[224,112], index: 6, kind: input, shape index: {}]
  %s7 = inlined_call_operand.vmem [shape: f32[112,16], index: 7, kind: input, shape index: {}]
  %s8 = inlined_call_operand.hbm [shape: f32[2,2], index: 8, kind: output, shape index: {}]
  %s9 = sld [smem:[#allocation0]]
  $region58: #{forward.1} parent=0
    _
  %s11 = ssub.s32 1, %s9
  %s12 = scalar_select 0, %s11, %s9
  $region1: #{forward.1} parent=0
    #allocation2 [shape = 'u8[262144]{0}', space=vmem, size = 0x40000, scoped, tag = 'input window, operand 1, single buffered']
    #allocation3 [shape = 's32[1]{0}', space=sflag, size = 0x4, scoped, tag = 'scoped memory for forward.1']
    #allocation4 [shape = 's32[1]{0}', space=sflag, size = 0x4, scoped, tag = 'scoped memory for forward.1']
    #allocation5 [shape = 'u8[102400]{0}', space=vmem, size = 0x19000, scoped, tag = 'input window, operand 4, single buffered']
    #allocation6 [shape = 's32[1]{0}', space=sflag, size = 0x4, scoped, tag = 'scoped memory for forward.1']
    #allocation7 [shape = 'u8[458752]{0}', space=vmem, size = 0x70000, scoped, tag = 'input window, operand 5, single buffered']
    #allocation8 [shape = 'u8[114688]{0}', space=vmem, size = 0x1c000, scoped, tag = 'input window, operand 6, single buffered']
    #allocation9 [shape = 's32[1]{0}', space=sflag, size = 0x4, scoped, tag = 'scoped memory for forward.1']
    #allocation10 [shape = 'u8[1024]{0}', space=vmem, size = 0x400, scoped, tag = 'output window, operand 0, single buffered']
    %13 = vsyncpa [#allocation3], 0
    %14 = vsyncpa [#allocation6], 0
    %15 = vsyncpa [#allocation9], 0
    %16 = vsyncpa [#allocation4], 0
    // Predicated region
    $region2: #{forward.1} parent=1 // pred_check
      _
    $region3: #{forward.1} parent=1 // pred_check_branch
      %18 = sbr.rel (0) target = $region5
    $region4: #{forward.1} parent=1 // pred_region
      _
    $region5: #{forward.1} parent=1 // pred_fallthru
      _
    // Predicated region
    $region6: #{forward.1} parent=1 // pred_check
      _
    $region7: #{forward.1} parent=1 // pred_check_branch
      %20 = sbr.rel (0) target = $region9
    $region8: #{forward.1} parent=1 // pred_region
      %22 = vsyncadd [#allocation3], 0
      %s23 = sshll.u32 %s1, 4
      %s24 = int_to_ptr.hbm [resolvable:$true] %s23
      %s25 = sshll.u32 [#allocation2], 4
      %s26 = int_to_ptr.vmem [resolvable:$true] %s25
      %31 = dma.hbm_to_vmem [thread:$0]  %s24, 8192, %s26, [#allocation3], 2048, 2048, 128
    $region9: #{forward.1} parent=1 // pred_fallthru
      _
    // Predicated region
    $region10: #{forward.1} parent=1 // pred_check
      _
    $region11: #{forward.1} parent=1 // pred_check_branch
      %33 = sbr.rel (0) target = $region13
    $region12: #{forward.1} parent=1 // pred_region
      _
    $region13: #{forward.1} parent=1 // pred_fallthru
      _
    // Predicated region
    $region14: #{forward.1} parent=1 // pred_check
      _
    $region15: #{forward.1} parent=1 // pred_check_branch
      %35 = sbr.rel (0) target = $region17
    $region16: #{forward.1} parent=1 // pred_region
      _
    $region17: #{forward.1} parent=1 // pred_fallthru
      _
    // Predicated region
    $region18: #{forward.1} parent=1 // pred_check
      _
    $region19: #{forward.1} parent=1 // pred_check_branch
      %37 = sbr.rel (0) target = $region21
    $region20: #{forward.1} parent=1 // pred_region
      %39 = vsyncadd [#allocation6], 0
      %s40 = sshll.u32 %s4, 4
      %s41 = int_to_ptr.hbm [resolvable:$true] %s40
      %s42 = sshll.u32 [#allocation5], 4
      %s43 = int_to_ptr.vmem [resolvable:$true] %s42
      %48 = dma.hbm_to_vmem [thread:$0]  %s41, 3200, %s43, [#allocation6], 128, 128, 8
    $region21: #{forward.1} parent=1 // pred_fallthru
      _
    // Predicated region
    $region22: #{forward.1} parent=1 // pred_check
      _
    $region23: #{forward.1} parent=1 // pred_check_branch
      %50 = sbr.rel (0) target = $region25
    $region24: #{forward.1} parent=1 // pred_region
      %52 = vsyncadd [#allocation6], 0
      %s53 = sshll.u32 %s5, 4
      %s54 = int_to_ptr.hbm [resolvable:$true] %s53
      %s55 = sshll.u32 [#allocation7], 4
      %s56 = int_to_ptr.vmem [resolvable:$true] %s55
      %61 = dma.hbm_to_vmem [thread:$0]  %s54, 14336, %s56, [#allocation6], 256, 256, 16
    $region25: #{forward.1} parent=1 // pred_fallthru
      _
    // Predicated region
    $region26: #{forward.1} parent=1 // pred_check
      _
    $region27: #{forward.1} parent=1 // pred_check_branch
      %63 = sbr.rel (0) target = $region29
    $region28: #{forward.1} parent=1 // pred_region
      %65 = vsyncadd [#allocation9], 0
      %s66 = sshll.u32 %s6, 4
      %s67 = int_to_ptr.hbm [resolvable:$true] %s66
      %s68 = sshll.u32 [#allocation8], 4
      %s69 = int_to_ptr.vmem [resolvable:$true] %s68
      %74 = dma.hbm_to_vmem [thread:$0]  %s67, 3584, %s69, [#allocation9], 128, 128, 8
    $region29: #{forward.1} parent=1 // pred_fallthru
      _
    // Predicated region
    $region30: #{forward.1} parent=1 // pred_check
      _
    $region31: #{forward.1} parent=1 // pred_check_branch
      %76 = sbr.rel (0) target = $region33
    $region32: #{forward.1} parent=1 // pred_region
      _
    $region33: #{forward.1} parent=1 // pred_fallthru
      _
    // Predicated region
    $region34: #{forward.1} parent=1 // pred_check
      _
    $region35: #{forward.1} parent=1 // pred_check_branch
      %78 = sbr.rel (0) target = $region37
    $region36: #{forward.1} parent=1 // pred_region
      %80 = dma.done [#allocation3], 8192
    $region37: #{forward.1} parent=1 // pred_fallthru
      _
    // Predicated region
    $region38: #{forward.1} parent=1 // pred_check
      _
    $region39: #{forward.1} parent=1 // pred_check_branch
      %82 = sbr.rel (0) target = $region41
    $region40: #{forward.1} parent=1 // pred_region
      %84 = dma.done [#allocation6], 3200
    $region41: #{forward.1} parent=1 // pred_fallthru
      _
    // Predicated region
    $region42: #{forward.1} parent=1 // pred_check
      _
    $region43: #{forward.1} parent=1 // pred_check_branch
      %86 = sbr.rel (0) target = $region45
    $region44: #{forward.1} parent=1 // pred_region
      %88 = dma.done [#allocation6], 14336
    $region45: #{forward.1} parent=1 // pred_fallthru
      _
    // Predicated region
    $region46: #{forward.1} parent=1 // pred_check
      _
    $region47: #{forward.1} parent=1 // pred_check_branch
      %90 = sbr.rel (0) target = $region49
    $region48: #{forward.1} parent=1 // pred_region
      %92 = dma.done [#allocation9], 3584
    $region49: #{forward.1} parent=1 // pred_fallthru
      _
    %v93 = vld [vmem:[%s0] sm:$0xff]
    %v94 = vld [vmem:[%s0 + $0x8] sm:$0xff]
    %v95 = vld [vmem:[%s0 + $0x10] sm:$0xff]
    %v96 = vld [vmem:[%s0 + $0x18] sm:$0xff]
    %v97 = vld [vmem:[#allocation2] sm:$0xff]
    %v98 = vld [vmem:[#allocation2 + $0x8] sm:$0xff]
    %v99 = vld [vmem:[#allocation2 + $0x10] sm:$0xff]
    %v100 = vld [vmem:[#allocation2 + $0x18] sm:$0xff]
    %v101 = vld [vmem:[#allocation2 + $0x20] sm:$0xff]
    %v102 = vld [vmem:[#allocation2 + $0x28] sm:$0xff]
    %v103 = vld [vmem:[#allocation2 + $0x30] sm:$0xff]
    %v104 = vld [vmem:[#allocation2 + $0x38] sm:$0xff]
    %v105 = vld [vmem:[#allocation2 + $0x40] sm:$0xff]
    %v106 = vld [vmem:[#allocation2 + $0x48] sm:$0xff]
    %v107 = vld [vmem:[#allocation2 + $0x50] sm:$0xff]
    %v108 = vld [vmem:[#allocation2 + $0x58] sm:$0xff]
    %v109 = vld [vmem:[#allocation2 + $0x60] sm:$0xff]
    %v110 = vld [vmem:[#allocation2 + $0x68] sm:$0xff]
    %v111 = vld [vmem:[#allocation2 + $0x70] sm:$0xff]
    %v112 = vld [vmem:[#allocation2 + $0x78] sm:$0xff]
    %v113 = vld [vmem:[#allocation2 + $0x80] sm:$0xff]
    %v114 = vld [vmem:[#allocation2 + $0x88] sm:$0xff]
    %v115 = vld [vmem:[#allocation2 + $0x90] sm:$0xff]
    %v116 = vld [vmem:[#allocation2 + $0x98] sm:$0xff]
    %v117 = vld [vmem:[#allocation2 + $0xa0] sm:$0xff]
    %v118 = vld [vmem:[#allocation2 + $0xa8] sm:$0xff]
    %v119 = vld [vmem:[#allocation2 + $0xb0] sm:$0xff]
    %v120 = vld [vmem:[#allocation2 + $0xb8] sm:$0xff]
    %v121 = vld [vmem:[#allocation2 + $0xc0] sm:$0xff]
    %v122 = vld [vmem:[#allocation2 + $0xc8] sm:$0xff]
    %v123 = vld [vmem:[#allocation2 + $0xd0] sm:$0xff]
    %v124 = vld [vmem:[#allocation2 + $0xd8] sm:$0xff]
    %v125 = vld [vmem:[#allocation2 + $0xe0] sm:$0xff]
    %v126 = vld [vmem:[#allocation2 + $0xe8] sm:$0xff]
    %v127 = vld [vmem:[#allocation2 + $0xf0] sm:$0xff]
    %v128 = vld [vmem:[#allocation2 + $0xf8] sm:$0xff]
    %v129 = vld [vmem:[#allocation2 + $0x100] sm:$0xff]
    %v130 = vld [vmem:[#allocation2 + $0x108] sm:$0xff]
    %v131 = vld [vmem:[#allocation2 + $0x110] sm:$0xff]
    %v132 = vld [vmem:[#allocation2 + $0x118] sm:$0xff]
    %v133 = vld [vmem:[#allocation2 + $0x120] sm:$0xff]
    %v134 = vld [vmem:[#allocation2 + $0x128] sm:$0xff]
    %v135 = vld [vmem:[#allocation2 + $0x130] sm:$0xff]
    %v136 = vld [vmem:[#allocation2 + $0x138] sm:$0xff]
    %v137 = vld [vmem:[#allocation2 + $0x140] sm:$0xff]
    %v138 = vld [vmem:[#allocation2 + $0x148] sm:$0xff]
    %v139 = vld [vmem:[#allocation2 + $0x150] sm:$0xff]
    %v140 = vld [vmem:[#allocation2 + $0x158] sm:$0xff]
    %v141 = vld [vmem:[#allocation2 + $0x160] sm:$0xff]
    %v142 = vld [vmem:[#allocation2 + $0x168] sm:$0xff]
    %v143 = vld [vmem:[#allocation2 + $0x170] sm:$0xff]
    %v144 = vld [vmem:[#allocation2 + $0x178] sm:$0xff]
    %v145 = vld [vmem:[#allocation2 + $0x180] sm:$0xff]
    %v146 = vld [vmem:[#allocation2 + $0x188] sm:$0xff]
    %v147 = vld [vmem:[#allocation2 + $0x190] sm:$0xff]
    %v148 = vld [vmem:[#allocation2 + $0x198] sm:$0xff]
    %v149 = vld [vmem:[#allocation2 + $0x1a0] sm:$0xff]
    %v150 = vld [vmem:[#allocation2 + $0x1a8] sm:$0xff]
    %v151 = vld [vmem:[#allocation2 + $0x1b0] sm:$0xff]
    %v152 = vld [vmem:[#allocation2 + $0x1b8] sm:$0xff]
    %v153 = vld [vmem:[#allocation2 + $0x1c0] sm:$0xff]
    %v154 = vld [vmem:[#allocation2 + $0x1c8] sm:$0xff]
    %v155 = vld [vmem:[#allocation2 + $0x1d0] sm:$0xff]
    %v156 = vld [vmem:[#allocation2 + $0x1d8] sm:$0xff]
    %v157 = vld [vmem:[#allocation2 + $0x1e0] sm:$0xff]
    %v158 = vld [vmem:[#allocation2 + $0x1e8] sm:$0xff]
    %v159 = vld [vmem:[#allocation2 + $0x1f0] sm:$0xff]
    %v160 = vld [vmem:[#allocation2 + $0x1f8] sm:$0xff]
    %v161 = vld [vmem:[%s2] sm:$0xff]
    %v162 = vld [vmem:[%s2 + $0x8] sm:$0xff]
    %v165 = vperm.slane %v161, 0
    %v166 = vperm.slane %v161, 1
    %v167 = vperm.slane %v161, 2
    %v168 = vperm.slane %v161, 3
    %v169 = vperm.slane %v161, 4
    %v170 = vperm.slane %v161, 5
    %v171 = vperm.slane %v161, 6
    %v172 = vperm.slane %v161, 7
    %v173 = vperm.slane %v162, 0
    %v174 = vperm.slane %v162, 1
    %v175 = vperm.slane %v162, 2
    %v176 = vperm.slane %v162, 3
    %v177 = vperm.slane %v162, 4
    %v178 = vperm.slane %v162, 5
    %v179 = vperm.slane %v162, 6
    %v180 = vperm.slane %v162, 7
    %vm197 = vcmask 261120
    %v199 = vsel %vm197, %v93, 0
    %v202 = vsel %vm197, %v94, 0
    %v205 = vsel %vm197, %v95, 0
    %v208 = vsel %vm197, %v96, 0
    %210 = vmatpush.msra.mxu0 0.0
    %211 = vmatpush.msra.mxu0 0.0
    %212 = vmatpush.msra.mxu0 0.0
    %213 = vmatpush.msra.mxu0 0.0
    %214 = vmatpush.msra.mxu0 0.0
    %215 = vmatpush.msra.mxu0 0.0
    %216 = vmatpush.msra.mxu0 0.0
    %217 = vmatpush.msra.mxu0 0.0
    %218 = vmatpush.msra.mxu0 0.0
    %219 = vmatpush.msra.mxu0 0.0
    %220 = vmatpush.msra.mxu0 0.0
    %221 = vmatpush.msra.mxu0 0.0
    %222 = vmatpush.msra.mxu0 %v145
    %223 = vmatpush.msra.mxu0 %v129
    %224 = vmatpush.msra.mxu0 %v113
    %225 = vmatpush.msra.mxu0 %v97
    %226 = vmatmul.f32.gmra.mxu0 %v199
    %v227 = vpop.f32.mrf.mxu0
    %v228 = vadd.f32 %v165, %v227
    %229 = vmatmul.f32.gmra.mxu0 %v202
    %v230 = vpop.f32.mrf.mxu0
    %v231 = vadd.f32 %v165, %v230
    %232 = vmatmul.f32.gmra.mxu0 %v205
    %v233 = vpop.f32.mrf.mxu0
    %v234 = vadd.f32 %v165, %v233
    %235 = vmatmul.f32.gmra.mxu0 %v208
    %v236 = vpop.f32.mrf.mxu0
    %v237 = vadd.f32 %v165, %v236
    %238 = vdwg.mxu0
    %239 = vmatpush.msra.mxu0 0.0
    %240 = vmatpush.msra.mxu0 0.0
    %241 = vmatpush.msra.mxu0 0.0
    %242 = vmatpush.msra.mxu0 0.0
    %243 = vmatpush.msra.mxu0 0.0
    %244 = vmatpush.msra.mxu0 0.0
    %245 = vmatpush.msra.mxu0 0.0
    %246 = vmatpush.msra.mxu0 0.0
    %247 = vmatpush.msra.mxu0 0.0
    %248 = vmatpush.msra.mxu0 0.0
    %249 = vmatpush.msra.mxu0 0.0
    %250 = vmatpush.msra.mxu0 0.0
    %251 = vmatpush.msra.mxu0 %v146
    %252 = vmatpush.msra.mxu0 %v130
    %253 = vmatpush.msra.mxu0 %v114
    %254 = vmatpush.msra.mxu0 %v98
    %255 = vmatmul.f32.gmra.mxu0 %v199
    %v256 = vpop.f32.mrf.mxu0
    %v257 = vadd.f32 %v166, %v256
    %258 = vmatmul.f32.gmra.mxu0 %v202
    %v259 = vpop.f32.mrf.mxu0
    %v260 = vadd.f32 %v166, %v259
    %261 = vmatmul.f32.gmra.mxu0 %v205
    %v262 = vpop.f32.mrf.mxu0
    %v263 = vadd.f32 %v166, %v262
    %264 = vmatmul.f32.gmra.mxu0 %v208
    %v265 = vpop.f32.mrf.mxu0
    %v266 = vadd.f32 %v166, %v265
    %267 = vdwg.mxu0
    %268 = vmatpush.msra.mxu0 0.0
    %269 = vmatpush.msra.mxu0 0.0
    %270 = vmatpush.msra.mxu0 0.0
    %271 = vmatpush.msra.mxu0 0.0
    %272 = vmatpush.msra.mxu0 0.0
    %273 = vmatpush.msra.mxu0 0.0
    %274 = vmatpush.msra.mxu0 0.0
    %275 = vmatpush.msra.mxu0 0.0
    %276 = vmatpush.msra.mxu0 0.0
    %277 = vmatpush.msra.mxu0 0.0
    %278 = vmatpush.msra.mxu0 0.0
    %279 = vmatpush.msra.mxu0 0.0
    %280 = vmatpush.msra.mxu0 %v147
    %281 = vmatpush.msra.mxu0 %v131
    %282 = vmatpush.msra.mxu0 %v115
    %283 = vmatpush.msra.mxu0 %v99
    %284 = vmatmul.f32.gmra.mxu0 %v199
    %v285 = vpop.f32.mrf.mxu0
    %v286 = vadd.f32 %v167, %v285
    %287 = vmatmul.f32.gmra.mxu0 %v202
    %v288 = vpop.f32.mrf.mxu0
    %v289 = vadd.f32 %v167, %v288
    %290 = vmatmul.f32.gmra.mxu0 %v205
    %v291 = vpop.f32.mrf.mxu0
    %v292 = vadd.f32 %v167, %v291
    %293 = vmatmul.f32.gmra.mxu0 %v208
    %v294 = vpop.f32.mrf.mxu0
    %v295 = vadd.f32 %v167, %v294
    %296 = vdwg.mxu0
    %297 = vmatpush.msra.mxu0 0.0
    %298 = vmatpush.msra.mxu0 0.0
    %299 = vmatpush.msra.mxu0 0.0
    %300 = vmatpush.msra.mxu0 0.0
    %301 = vmatpush.msra.mxu0 0.0
    %302 = vmatpush.msra.mxu0 0.0
    %303 = vmatpush.msra.mxu0 0.0
    %304 = vmatpush.msra.mxu0 0.0
    %305 = vmatpush.msra.mxu0 0.0
    %306 = vmatpush.msra.mxu0 0.0
    %307 = vmatpush.msra.mxu0 0.0
    %308 = vmatpush.msra.mxu0 0.0
    %309 = vmatpush.msra.mxu0 %v148
    %310 = vmatpush.msra.mxu0 %v132
    %311 = vmatpush.msra.mxu0 %v116
    %312 = vmatpush.msra.mxu0 %v100
    %313 = vmatmul.f32.gmra.mxu0 %v199
    %v314 = vpop.f32.mrf.mxu0
    %v315 = vadd.f32 %v168, %v314
    %316 = vmatmul.f32.gmra.mxu0 %v202
    %v317 = vpop.f32.mrf.mxu0
    %v318 = vadd.f32 %v168, %v317
    %319 = vmatmul.f32.gmra.mxu0 %v205
    %v320 = vpop.f32.mrf.mxu0
    %v321 = vadd.f32 %v168, %v320
    %322 = vmatmul.f32.gmra.mxu0 %v208
    %v323 = vpop.f32.mrf.mxu0
    %v324 = vadd.f32 %v168, %v323
    %325 = vdwg.mxu0
    %326 = vmatpush.msra.mxu0 0.0
    %327 = vmatpush.msra.mxu0 0.0
    %328 = vmatpush.msra.mxu0 0.0
    %329 = vmatpush.msra.mxu0 0.0
    %330 = vmatpush.msra.mxu0 0.0
    %331 = vmatpush.msra.mxu0 0.0
    %332 = vmatpush.msra.mxu0 0.0
    %333 = vmatpush.msra.mxu0 0.0
    %334 = vmatpush.msra.mxu0 0.0
    %335 = vmatpush.msra.mxu0 0.0
    %336 = vmatpush.msra.mxu0 0.0
    %337 = vmatpush.msra.mxu0 0.0
    %338 = vmatpush.msra.mxu0 %v149
    %339 = vmatpush.msra.mxu0 %v133
    %340 = vmatpush.msra.mxu0 %v117
    %341 = vmatpush.msra.mxu0 %v101
    %342 = vmatmul.f32.gmra.mxu0 %v199
    %v343 = vpop.f32.mrf.mxu0
    %v344 = vadd.f32 %v169, %v343
    %345 = vmatmul.f32.gmra.mxu0 %v202
    %v346 = vpop.f32.mrf.mxu0
    %v347 = vadd.f32 %v169, %v346
    %348 = vmatmul.f32.gmra.mxu0 %v205
    %v349 = vpop.f32.mrf.mxu0
    %v350 = vadd.f32 %v169, %v349
    %351 = vmatmul.f32.gmra.mxu0 %v208
    %v352 = vpop.f32.mrf.mxu0
    %v353 = vadd.f32 %v169, %v352
    %354 = vdwg.mxu0
    %355 = vmatpush.msra.mxu0 0.0
    %356 = vmatpush.msra.mxu0 0.0
    %357 = vmatpush.msra.mxu0 0.0
    %358 = vmatpush.msra.mxu0 0.0
    %359 = vmatpush.msra.mxu0 0.0
    %360 = vmatpush.msra.mxu0 0.0
    %361 = vmatpush.msra.mxu0 0.0
    %362 = vmatpush.msra.mxu0 0.0
    %363 = vmatpush.msra.mxu0 0.0
    %364 = vmatpush.msra.mxu0 0.0
    %365 = vmatpush.msra.mxu0 0.0
    %366 = vmatpush.msra.mxu0 0.0
    %367 = vmatpush.msra.mxu0 %v150
    %368 = vmatpush.msra.mxu0 %v134
    %369 = vmatpush.msra.mxu0 %v118
    %370 = vmatpush.msra.mxu0 %v102
    %371 = vmatmul.f32.gmra.mxu0 %v199
    %v372 = vpop.f32.mrf.mxu0
    %v373 = vadd.f32 %v170, %v372
    %374 = vmatmul.f32.gmra.mxu0 %v202
    %v375 = vpop.f32.mrf.mxu0
    %v376 = vadd.f32 %v170, %v375
    %377 = vmatmul.f32.gmra.mxu0 %v205
    %v378 = vpop.f32.mrf.mxu0
    %v379 = vadd.f32 %v170, %v378
    %380 = vmatmul.f32.gmra.mxu0 %v208
    %v381 = vpop.f32.mrf.mxu0
    %v382 = vadd.f32 %v170, %v381
    %383 = vdwg.mxu0
    %384 = vmatpush.msra.mxu0 0.0
    %385 = vmatpush.msra.mxu0 0.0
    %386 = vmatpush.msra.mxu0 0.0
    %387 = vmatpush.msra.mxu0 0.0
    %388 = vmatpush.msra.mxu0 0.0
    %389 = vmatpush.msra.mxu0 0.0
    %390 = vmatpush.msra.mxu0 0.0
    %391 = vmatpush.msra.mxu0 0.0
    %392 = vmatpush.msra.mxu0 0.0
    %393 = vmatpush.msra.mxu0 0.0
    %394 = vmatpush.msra.mxu0 0.0
    %395 = vmatpush.msra.mxu0 0.0
    %396 = vmatpush.msra.mxu0 %v151
    %397 = vmatpush.msra.mxu0 %v135
    %398 = vmatpush.msra.mxu0 %v119
    %399 = vmatpush.msra.mxu0 %v103
    %400 = vmatmul.f32.gmra.mxu0 %v199
    %v401 = vpop.f32.mrf.mxu0
    %v402 = vadd.f32 %v171, %v401
    %403 = vmatmul.f32.gmra.mxu0 %v202
    %v404 = vpop.f32.mrf.mxu0
    %v405 = vadd.f32 %v171, %v404
    %406 = vmatmul.f32.gmra.mxu0 %v205
    %v407 = vpop.f32.mrf.mxu0
    %v408 = vadd.f32 %v171, %v407
    %409 = vmatmul.f32.gmra.mxu0 %v208
    %v410 = vpop.f32.mrf.mxu0
    %v411 = vadd.f32 %v171, %v410
    %412 = vdwg.mxu0
    %413 = vmatpush.msra.mxu0 0.0
    %414 = vmatpush.msra.mxu0 0.0
    %415 = vmatpush.msra.mxu0 0.0
    %416 = vmatpush.msra.mxu0 0.0
    %417 = vmatpush.msra.mxu0 0.0
    %418 = vmatpush.msra.mxu0 0.0
    %419 = vmatpush.msra.mxu0 0.0
    %420 = vmatpush.msra.mxu0 0.0
    %421 = vmatpush.msra.mxu0 0.0
    %422 = vmatpush.msra.mxu0 0.0
    %423 = vmatpush.msra.mxu0 0.0
    %424 = vmatpush.msra.mxu0 0.0
    %425 = vmatpush.msra.mxu0 %v152
    %426 = vmatpush.msra.mxu0 %v136
    %427 = vmatpush.msra.mxu0 %v120
    %428 = vmatpush.msra.mxu0 %v104
    %429 = vmatmul.f32.gmra.mxu0 %v199
    %v430 = vpop.f32.mrf.mxu0
    %v431 = vadd.f32 %v172, %v430
    %432 = vmatmul.f32.gmra.mxu0 %v202
    %v433 = vpop.f32.mrf.mxu0
    %v434 = vadd.f32 %v172, %v433
    %435 = vmatmul.f32.gmra.mxu0 %v205
    %v436 = vpop.f32.mrf.mxu0
    %v437 = vadd.f32 %v172, %v436
    %438 = vmatmul.f32.gmra.mxu0 %v208
    %v439 = vpop.f32.mrf.mxu0
    %v440 = vadd.f32 %v172, %v439
    %441 = vdwg.mxu0
    %442 = vmatpush.msra.mxu0 0.0
    %443 = vmatpush.msra.mxu0 0.0
    %444 = vmatpush.msra.mxu0 0.0
    %445 = vmatpush.msra.mxu0 0.0
    %446 = vmatpush.msra.mxu0 0.0
    %447 = vmatpush.msra.mxu0 0.0
    %448 = vmatpush.msra.mxu0 0.0
    %449 = vmatpush.msra.mxu0 0.0
    %450 = vmatpush.msra.mxu0 0.0
    %451 = vmatpush.msra.mxu0 0.0
    %452 = vmatpush.msra.mxu0 0.0
    %453 = vmatpush.msra.mxu0 0.0
    %454 = vmatpush.msra.mxu0 %v153
    %455 = vmatpush.msra.mxu0 %v137
    %456 = vmatpush.msra.mxu0 %v121
    %457 = vmatpush.msra.mxu0 %v105
    %458 = vmatmul.f32.gmra.mxu0 %v199
    %v459 = vpop.f32.mrf.mxu0
    %v460 = vadd.f32 %v173, %v459
    %461 = vmatmul.f32.gmra.mxu0 %v202
    %v462 = vpop.f32.mrf.mxu0
    %v463 = vadd.f32 %v173, %v462
    %464 = vmatmul.f32.gmra.mxu0 %v205
    %v465 = vpop.f32.mrf.mxu0
    %v466 = vadd.f32 %v173, %v465
    %467 = vmatmul.f32.gmra.mxu0 %v208
    %v468 = vpop.f32.mrf.mxu0
    %v469 = vadd.f32 %v173, %v468
    %470 = vdwg.mxu0
    %471 = vmatpush.msra.mxu0 0.0
    %472 = vmatpush.msra.mxu0 0.0
    %473 = vmatpush.msra.mxu0 0.0
    %474 = vmatpush.msra.mxu0 0.0
    %475 = vmatpush.msra.mxu0 0.0
    %476 = vmatpush.msra.mxu0 0.0
    %477 = vmatpush.msra.mxu0 0.0
    %478 = vmatpush.msra.mxu0 0.0
    %479 = vmatpush.msra.mxu0 0.0
    %480 = vmatpush.msra.mxu0 0.0
    %481 = vmatpush.msra.mxu0 0.0
    %482 = vmatpush.msra.mxu0 0.0
    %483 = vmatpush.msra.mxu0 %v154
    %484 = vmatpush.msra.mxu0 %v138
    %485 = vmatpush.msra.mxu0 %v122
    %486 = vmatpush.msra.mxu0 %v106
    %487 = vmatmul.f32.gmra.mxu0 %v199
    %v488 = vpop.f32.mrf.mxu0
    %v489 = vadd.f32 %v174, %v488
    %490 = vmatmul.f32.gmra.mxu0 %v202
    %v491 = vpop.f32.mrf.mxu0
    %v492 = vadd.f32 %v174, %v491
    %493 = vmatmul.f32.gmra.mxu0 %v205
    %v494 = vpop.f32.mrf.mxu0
    %v495 = vadd.f32 %v174, %v494
    %496 = vmatmul.f32.gmra.mxu0 %v208
    %v497 = vpop.f32.mrf.mxu0
    %v498 = vadd.f32 %v174, %v497
    %499 = vdwg.mxu0
    %500 = vmatpush.msra.mxu0 0.0
    %501 = vmatpush.msra.mxu0 0.0
    %502 = vmatpush.msra.mxu0 0.0
    %503 = vmatpush.msra.mxu0 0.0
    %504 = vmatpush.msra.mxu0 0.0
    %505 = vmatpush.msra.mxu0 0.0
    %506 = vmatpush.msra.mxu0 0.0
    %507 = vmatpush.msra.mxu0 0.0
    %508 = vmatpush.msra.mxu0 0.0
    %509 = vmatpush.msra.mxu0 0.0
    %510 = vmatpush.msra.mxu0 0.0
    %511 = vmatpush.msra.mxu0 0.0
    %512 = vmatpush.msra.mxu0 %v155
    %513 = vmatpush.msra.mxu0 %v139
    %514 = vmatpush.msra.mxu0 %v123
    %515 = vmatpush.msra.mxu0 %v107
    %516 = vmatmul.f32.gmra.mxu0 %v199
    %v517 = vpop.f32.mrf.mxu0
    %v518 = vadd.f32 %v175, %v517
    %519 = vmatmul.f32.gmra.mxu0 %v202
    %v520 = vpop.f32.mrf.mxu0
    %v521 = vadd.f32 %v175, %v520
    %522 = vmatmul.f32.gmra.mxu0 %v205
    %v523 = vpop.f32.mrf.mxu0
    %v524 = vadd.f32 %v175, %v523
    %525 = vmatmul.f32.gmra.mxu0 %v208
    %v526 = vpop.f32.mrf.mxu0
    %v527 = vadd.f32 %v175, %v526
    %528 = vdwg.mxu0
    %529 = vmatpush.msra.mxu0 0.0
    %530 = vmatpush.msra.mxu0 0.0
    %531 = vmatpush.msra.mxu0 0.0
    %532 = vmatpush.msra.mxu0 0.0
    %533 = vmatpush.msra.mxu0 0.0
    %534 = vmatpush.msra.mxu0 0.0
    %535 = vmatpush.msra.mxu0 0.0
    %536 = vmatpush.msra.mxu0 0.0
    %537 = vmatpush.msra.mxu0 0.0
    %538 = vmatpush.msra.mxu0 0.0
    %539 = vmatpush.msra.mxu0 0.0
    %540 = vmatpush.msra.mxu0 0.0
    %541 = vmatpush.msra.mxu0 %v156
    %542 = vmatpush.msra.mxu0 %v140
    %543 = vmatpush.msra.mxu0 %v124
    %544 = vmatpush.msra.mxu0 %v108
    %545 = vmatmul.f32.gmra.mxu0 %v199
    %v546 = vpop.f32.mrf.mxu0
    %v547 = vadd.f32 %v176, %v546
    %548 = vmatmul.f32.gmra.mxu0 %v202
    %v549 = vpop.f32.mrf.mxu0
    %v550 = vadd.f32 %v176, %v549
    %551 = vmatmul.f32.gmra.mxu0 %v205
    %v552 = vpop.f32.mrf.mxu0
    %v553 = vadd.f32 %v176, %v552
    %554 = vmatmul.f32.gmra.mxu0 %v208
    %v555 = vpop.f32.mrf.mxu0
    %v556 = vadd.f32 %v176, %v555
    %557 = vdwg.mxu0
    %558 = vmatpush.msra.mxu0 0.0
    %559 = vmatpush.msra.mxu0 0.0
    %560 = vmatpush.msra.mxu0 0.0
    %561 = vmatpush.msra.mxu0 0.0
    %562 = vmatpush.msra.mxu0 0.0
    %563 = vmatpush.msra.mxu0 0.0
    %564 = vmatpush.msra.mxu0 0.0
    %565 = vmatpush.msra.mxu0 0.0
    %566 = vmatpush.msra.mxu0 0.0
    %567 = vmatpush.msra.mxu0 0.0
    %568 = vmatpush.msra.mxu0 0.0
    %569 = vmatpush.msra.mxu0 0.0
    %570 = vmatpush.msra.mxu0 %v157
    %571 = vmatpush.msra.mxu0 %v141
    %572 = vmatpush.msra.mxu0 %v125
    %573 = vmatpush.msra.mxu0 %v109
    %574 = vmatmul.f32.gmra.mxu0 %v199
    %v575 = vpop.f32.mrf.mxu0
    %v576 = vadd.f32 %v177, %v575
    %577 = vmatmul.f32.gmra.mxu0 %v202
    %v578 = vpop.f32.mrf.mxu0
    %v579 = vadd.f32 %v177, %v578
    %580 = vmatmul.f32.gmra.mxu0 %v205
    %v581 = vpop.f32.mrf.mxu0
    %v582 = vadd.f32 %v177, %v581
    %583 = vmatmul.f32.gmra.mxu0 %v208
    %v584 = vpop.f32.mrf.mxu0
    %v585 = vadd.f32 %v177, %v584
    %586 = vdwg.mxu0
    %587 = vmatpush.msra.mxu0 0.0
    %588 = vmatpush.msra.mxu0 0.0
    %589 = vmatpush.msra.mxu0 0.0
    %590 = vmatpush.msra.mxu0 0.0
    %591 = vmatpush.msra.mxu0 0.0
    %592 = vmatpush.msra.mxu0 0.0
    %593 = vmatpush.msra.mxu0 0.0
    %594 = vmatpush.msra.mxu0 0.0
    %595 = vmatpush.msra.mxu0 0.0
    %596 = vmatpush.msra.mxu0 0.0
    %597 = vmatpush.msra.mxu0 0.0
    %598 = vmatpush.msra.mxu0 0.0
    %599 = vmatpush.msra.mxu0 %v158
    %600 = vmatpush.msra.mxu0 %v142
    %601 = vmatpush.msra.mxu0 %v126
    %602 = vmatpush.msra.mxu0 %v110
    %603 = vmatmul.f32.gmra.mxu0 %v199
    %v604 = vpop.f32.mrf.mxu0
    %v605 = vadd.f32 %v178, %v604
    %606 = vmatmul.f32.gmra.mxu0 %v202
    %v607 = vpop.f32.mrf.mxu0
    %v608 = vadd.f32 %v178, %v607
    %609 = vmatmul.f32.gmra.mxu0 %v205
    %v610 = vpop.f32.mrf.mxu0
    %v611 = vadd.f32 %v178, %v610
    %612 = vmatmul.f32.gmra.mxu0 %v208
    %v613 = vpop.f32.mrf.mxu0
    %v614 = vadd.f32 %v178, %v613
    %615 = vdwg.mxu0
    %616 = vmatpush.msra.mxu0 0.0
    %617 = vmatpush.msra.mxu0 0.0
    %618 = vmatpush.msra.mxu0 0.0
    %619 = vmatpush.msra.mxu0 0.0
    %620 = vmatpush.msra.mxu0 0.0
    %621 = vmatpush.msra.mxu0 0.0
    %622 = vmatpush.msra.mxu0 0.0
    %623 = vmatpush.msra.mxu0 0.0
    %624 = vmatpush.msra.mxu0 0.0
    %625 = vmatpush.msra.mxu0 0.0
    %626 = vmatpush.msra.mxu0 0.0
    %627 = vmatpush.msra.mxu0 0.0
    %628 = vmatpush.msra.mxu0 %v159
    %629 = vmatpush.msra.mxu0 %v143
    %630 = vmatpush.msra.mxu0 %v127
    %631 = vmatpush.msra.mxu0 %v111
    %632 = vmatmul.f32.gmra.mxu0 %v199
    %v633 = vpop.f32.mrf.mxu0
    %v634 = vadd.f32 %v179, %v633
    %635 = vmatmul.f32.gmra.mxu0 %v202
    %v636 = vpop.f32.mrf.mxu0
    %v637 = vadd.f32 %v179, %v636
    %638 = vmatmul.f32.gmra.mxu0 %v205
    %v639 = vpop.f32.mrf.mxu0
    %v640 = vadd.f32 %v179, %v639
    %641 = vmatmul.f32.gmra.mxu0 %v208
    %v642 = vpop.f32.mrf.mxu0
    %v643 = vadd.f32 %v179, %v642
    %644 = vdwg.mxu0
    %645 = vmatpush.msra.mxu0 0.0
    %646 = vmatpush.msra.mxu0 0.0
    %647 = vmatpush.msra.mxu0 0.0
    %648 = vmatpush.msra.mxu0 0.0
    %649 = vmatpush.msra.mxu0 0.0
    %650 = vmatpush.msra.mxu0 0.0
    %651 = vmatpush.msra.mxu0 0.0
    %652 = vmatpush.msra.mxu0 0.0
    %653 = vmatpush.msra.mxu0 0.0
    %654 = vmatpush.msra.mxu0 0.0
    %655 = vmatpush.msra.mxu0 0.0
    %656 = vmatpush.msra.mxu0 0.0
    %657 = vmatpush.msra.mxu0 %v160
    %658 = vmatpush.msra.mxu0 %v144
    %659 = vmatpush.msra.mxu0 %v128
    %660 = vmatpush.msra.mxu0 %v112
    %661 = vmatmul.f32.gmra.mxu0 %v199
    %v662 = vpop.f32.mrf.mxu0
    %v663 = vadd.f32 %v180, %v662
    %664 = vmatmul.f32.gmra.mxu0 %v202
    %v665 = vpop.f32.mrf.mxu0
    %v666 = vadd.f32 %v180, %v665
    %667 = vmatmul.f32.gmra.mxu0 %v205
    %v668 = vpop.f32.mrf.mxu0
    %v669 = vadd.f32 %v180, %v668
    %670 = vmatmul.f32.gmra.mxu0 %v208
    %v671 = vpop.f32.mrf.mxu0
    %v672 = vadd.f32 %v180, %v671
    %673 = vdwg.mxu0
    %v674 = vmul.f32 %v228, %v228
    %v675 = vmul.f32 %v257, %v257
    %v676 = vmul.f32 %v286, %v286
    %v677 = vmul.f32 %v315, %v315
    %v678 = vmul.f32 %v344, %v344
    %v679 = vmul.f32 %v373, %v373
    %v680 = vmul.f32 %v402, %v402
    %v681 = vmul.f32 %v431, %v431
    %v682 = vmul.f32 %v460, %v460
    %v683 = vmul.f32 %v489, %v489
    %v684 = vmul.f32 %v518, %v518
    %v685 = vmul.f32 %v547, %v547
    %v686 = vmul.f32 %v576, %v576
    %v687 = vmul.f32 %v605, %v605
    %v688 = vmul.f32 %v634, %v634
    %v689 = vmul.f32 %v663, %v663
    %v690 = vmul.f32 %v231, %v231
    %v691 = vmul.f32 %v260, %v260
    %v692 = vmul.f32 %v289, %v289
    %v693 = vmul.f32 %v318, %v318
    %v694 = vmul.f32 %v347, %v347
    %v695 = vmul.f32 %v376, %v376
    %v696 = vmul.f32 %v405, %v405
    %v697 = vmul.f32 %v434, %v434
    %v698 = vmul.f32 %v463, %v463
    %v699 = vmul.f32 %v492, %v492
    %v700 = vmul.f32 %v521, %v521
    %v701 = vmul.f32 %v550, %v550
    %v702 = vmul.f32 %v579, %v579
    %v703 = vmul.f32 %v608, %v608
    %v704 = vmul.f32 %v637, %v637
    %v705 = vmul.f32 %v666, %v666
    %v706 = vmul.f32 %v234, %v234
    %v707 = vmul.f32 %v263, %v263
    %v708 = vmul.f32 %v292, %v292
    %v709 = vmul.f32 %v321, %v321
    %v710 = vmul.f32 %v350, %v350
    %v711 = vmul.f32 %v379, %v379
    %v712 = vmul.f32 %v408, %v408
    %v713 = vmul.f32 %v437, %v437
    %v714 = vmul.f32 %v466, %v466
    %v715 = vmul.f32 %v495, %v495
    %v716 = vmul.f32 %v524, %v524
    %v717 = vmul.f32 %v553, %v553
    %v718 = vmul.f32 %v582, %v582
    %v719 = vmul.f32 %v611, %v611
    %v720 = vmul.f32 %v640, %v640
    %v721 = vmul.f32 %v669, %v669
    %v722 = vmul.f32 %v237, %v237
    %v723 = vmul.f32 %v266, %v266
    %v724 = vmul.f32 %v295, %v295
    %v725 = vmul.f32 %v324, %v324
    %v726 = vmul.f32 %v353, %v353
    %v727 = vmul.f32 %v382, %v382
    %v728 = vmul.f32 %v411, %v411
    %v729 = vmul.f32 %v440, %v440
    %v730 = vmul.f32 %v469, %v469
    %v731 = vmul.f32 %v498, %v498
    %v732 = vmul.f32 %v527, %v527
    %v733 = vmul.f32 %v556, %v556
    %v734 = vmul.f32 %v585, %v585
    %v735 = vmul.f32 %v614, %v614
    %v736 = vmul.f32 %v643, %v643
    %v737 = vmul.f32 %v672, %v672
    %v738 = vadd.f32 %v674, %v676
    %v739 = vadd.f32 %v675, %v677
    %v740 = vadd.f32 %v690, %v692
    %v741 = vadd.f32 %v691, %v693
    %v742 = vadd.f32 %v706, %v708
    %v743 = vadd.f32 %v707, %v709
    %v744 = vadd.f32 %v722, %v724
    %v745 = vadd.f32 %v723, %v725
    %v746 = vadd.f32 %v738, %v678
    %v747 = vadd.f32 %v739, %v679
    %v748 = vadd.f32 %v740, %v694
    %v749 = vadd.f32 %v741, %v695
    %v750 = vadd.f32 %v742, %v710
    %v751 = vadd.f32 %v743, %v711
    %v752 = vadd.f32 %v744, %v726
    %v753 = vadd.f32 %v745, %v727
    %v754 = vadd.f32 %v746, %v680
    %v755 = vadd.f32 %v747, %v681
    %v756 = vadd.f32 %v748, %v696
    %v757 = vadd.f32 %v749, %v697
    %v758 = vadd.f32 %v750, %v712
    %v759 = vadd.f32 %v751, %v713
    %v760 = vadd.f32 %v752, %v728
    %v761 = vadd.f32 %v753, %v729
    %v762 = vadd.f32 %v754, %v682
    %v763 = vadd.f32 %v755, %v683
    %v764 = vadd.f32 %v756, %v698
    %v765 = vadd.f32 %v757, %v699
    %v766 = vadd.f32 %v758, %v714
    %v767 = vadd.f32 %v759, %v715
    %v768 = vadd.f32 %v760, %v730
    %v769 = vadd.f32 %v761, %v731
    %v770 = vadd.f32 %v762, %v684
    %v771 = vadd.f32 %v763, %v685
    %v772 = vadd.f32 %v764, %v700
    %v773 = vadd.f32 %v765, %v701
    %v774 = vadd.f32 %v766, %v716
    %v775 = vadd.f32 %v767, %v717
    %v776 = vadd.f32 %v768, %v732
    %v777 = vadd.f32 %v769, %v733
    %v778 = vadd.f32 %v770, %v686
    %v779 = vadd.f32 %v771, %v687
    %v780 = vadd.f32 %v772, %v702
    %v781 = vadd.f32 %v773, %v703
    %v782 = vadd.f32 %v774, %v718
    %v783 = vadd.f32 %v775, %v719
    %v784 = vadd.f32 %v776, %v734
    %v785 = vadd.f32 %v777, %v735
    %v786 = vadd.f32 %v778, %v688
    %v787 = vadd.f32 %v779, %v689
    %v788 = vadd.f32 %v780, %v704
    %v789 = vadd.f32 %v781, %v705
    %v790 = vadd.f32 %v782, %v720
    %v791 = vadd.f32 %v783, %v721
    %v792 = vadd.f32 %v784, %v736
    %v793 = vadd.f32 %v785, %v737
    %v794 = vlog2.pop %v786
    %v795 = vmul.f32 %v794, 0.6931472
    %v796 = vlog2.pop %v787
    %v797 = vmul.f32 %v796, 0.6931472
    %v798 = vlog2.pop %v788
    %v799 = vmul.f32 %v798, 0.6931472
    %v800 = vlog2.pop %v789
    %v801 = vmul.f32 %v800, 0.6931472
    %v802 = vlog2.pop %v790
    %v803 = vmul.f32 %v802, 0.6931472
    %v804 = vlog2.pop %v791
    %v805 = vmul.f32 %v804, 0.6931472
    %v806 = vlog2.pop %v792
    %v807 = vmul.f32 %v806, 0.6931472
    %v808 = vlog2.pop %v793
    %v809 = vmul.f32 %v808, 0.6931472
    %v810 = vld [vmem:[%s3] ss:$2 sm:$0x3]
    %v812 = vperm.slane %v810, 0
    %v813 = vperm.slane %v810, 1
    %v816 = vmul.f32 %v795, %v812
    %v817 = vmul.f32 %v797, %v813
    %v818 = vmul.f32 %v799, %v812
    %v819 = vmul.f32 %v801, %v813
    %v820 = vmul.f32 %v803, %v812
    %v821 = vmul.f32 %v805, %v813
    %v822 = vmul.f32 %v807, %v812
    %v823 = vmul.f32 %v809, %v813
    %s824 = scalar_lea.vmem %s3, 1
    %v825 = vld [vmem:[%s824] ss:$2 sm:$0x3]
    %v827 = vperm.slane %v825, 0
    %v828 = vperm.slane %v825, 1
    %v831 = vadd.f32 %v816, %v827
    %v832 = vadd.f32 %v817, %v828
    %v833 = vadd.f32 %v818, %v827
    %v834 = vadd.f32 %v819, %v828
    %v835 = vadd.f32 %v820, %v827
    %v836 = vadd.f32 %v821, %v828
    %v837 = vadd.f32 %v822, %v827
    %v838 = vadd.f32 %v823, %v828
    %vm839 = vcmask 785408
    %v840 = vsel %vm839, %v832, -inf
    %v841 = vmax.f32 %v831, %v840
    %842 = vmax.xlane.f32.xlu0 %v841
    %v843 = vpop.xlane.xlu0 %842
    %v844 = vsel %vm839, %v834, -inf
    %v845 = vmax.f32 %v833, %v844
    %846 = vmax.xlane.f32.xlu0 %v845
    %v847 = vpop.xlane.xlu0 %846
    %v848 = vsel %vm839, %v836, -inf
    %v849 = vmax.f32 %v835, %v848
    %850 = vmax.xlane.f32.xlu0 %v849
    %v851 = vpop.xlane.xlu0 %850
    %v852 = vsel %vm839, %v838, -inf
    %v853 = vmax.f32 %v837, %v852
    %854 = vmax.xlane.f32.xlu0 %v853
    %v855 = vpop.xlane.xlu0 %854
    %v856 = vsel %vm839, %v832, 0.0
    %v857 = vadd.f32 %v831, %v856
    %858 = vadd.xlane.f32.xlu0 %v857
    %v859 = vpop.xlane.xlu0 %858
    %v860 = vsel %vm839, %v834, 0.0
    %v861 = vadd.f32 %v833, %v860
    %862 = vadd.xlane.f32.xlu0 %v861
    %v863 = vpop.xlane.xlu0 %862
    %v864 = vsel %vm839, %v836, 0.0
    %v865 = vadd.f32 %v835, %v864
    %866 = vadd.xlane.f32.xlu0 %v865
    %v867 = vpop.xlane.xlu0 %866
    %v868 = vsel %vm839, %v838, 0.0
    %v869 = vadd.f32 %v837, %v868
    %870 = vadd.xlane.f32.xlu0 %v869
    %v871 = vpop.xlane.xlu0 %870
    %v872 = vrcp.pop 224.0
    %v873 = vmul.f32 224.0, %v872
    %v874 = vsub.f32 1.0, %v873
    %v875 = vmul.f32 %v872, %v874
    %v876 = vadd.f32 %v872, %v875
    %vm877 = vweird.f32 %v872
    %v878 = vsel %vm877, %v872, %v876
    %v879 = vmul.f32 %v859, %v878
    %v880 = vmul.f32 %v863, %v878
    %v881 = vmul.f32 %v867, %v878
    %v882 = vmul.f32 %v871, %v878
    %vm883 = vcmask 7168
    %v884 = vsel %vm883, %v843, %v879
    %v885 = vsel %vm883, %v847, %v880
    %v886 = vsel %vm883, %v851, %v881
    %v887 = vsel %vm883, %v855, %v882
    %v888 = vld [vmem:[#allocation5] sm:$0x3]
    %v890 = vsel %vm197, %v888, 0
    %892 = vmatpush.msra.mxu0 0.0
    %893 = vmatpush.msra.mxu0 0.0
    %894 = vmatpush.msra.mxu0 0.0
    %895 = vmatpush.msra.mxu0 0.0
    %896 = vmatpush.msra.mxu0 0.0
    %897 = vmatpush.msra.mxu0 0.0
    %898 = vmatpush.msra.mxu0 0.0
    %899 = vmatpush.msra.mxu0 0.0
    %900 = vmatpush.msra.mxu0 0.0
    %901 = vmatpush.msra.mxu0 0.0
    %902 = vmatpush.msra.mxu0 0.0
    %903 = vmatpush.msra.mxu0 0.0
    %904 = vmatpush.msra.mxu0 %v887
    %905 = vmatpush.msra.mxu0 %v886
    %906 = vmatpush.msra.mxu0 %v885
    %907 = vmatpush.msra.mxu0 %v884
    %908 = vmatmul.f32.gmra.mxu0 %v890
    %v909 = vpop.f32.mrf.mxu0
    %v910 = vadd.f32 0.0, %v909
    %911 = vdwg.mxu0
    %v912 = vmax.f32 %v910, 0.0
    %v913 = vld [vmem:[#allocation5 + $0x8] sm:$0xff]
    %v914 = vld [vmem:[#allocation5 + $0x10] sm:$0xff]
    %v915 = vld [vmem:[#allocation5 + $0x18] sm:$0xff]
    %v916 = vld [vmem:[#allocation5 + $0x20] sm:$0xff]
    %vm917 = vcmask 15360
    %v919 = vsel %vm917, %v913, 0
    %v922 = vsel %vm917, %v914, 0
    %v925 = vsel %vm917, %v915, 0
    %v928 = vsel %vm917, %v916, 0
    %vm930 = vcmask 1041408
    %v932 = vsel %vm930, %v912, 0
    %934 = vmatpush.msra.mxu0 0.0
    %935 = vmatpush.msra.mxu0 0.0
    %936 = vmatpush.msra.mxu0 0.0
    %937 = vmatpush.msra.mxu0 0.0
    %938 = vmatpush.msra.mxu0 0.0
    %939 = vmatpush.msra.mxu0 0.0
    %940 = vmatpush.msra.mxu0 0.0
    %941 = vmatpush.msra.mxu0 0.0
    %942 = vmatpush.msra.mxu0 0.0
    %943 = vmatpush.msra.mxu0 0.0
    %944 = vmatpush.msra.mxu0 0.0
    %945 = vmatpush.msra.mxu0 0.0
    %946 = vmatpush.msra.mxu0 0.0
    %947 = vmatpush.msra.mxu0 0.0
    %948 = vmatpush.msra.mxu0 0.0
    %949 = vmatpush.msra.mxu0 %v932
    %950 = vmatmul.f32.gmra.mxu0 %v919
    %v951 = vpop.f32.mrf.mxu0
    %v952 = vadd.f32 0.0, %v951
    %953 = vmatmul.f32.gmra.mxu0 %v922
    %v954 = vpop.f32.mrf.mxu0
    %v955 = vadd.f32 0.0, %v954
    %956 = vmatmul.f32.gmra.mxu0 %v925
    %v957 = vpop.f32.mrf.mxu0
    %v958 = vadd.f32 0.0, %v957
    %959 = vmatmul.f32.gmra.mxu0 %v928
    %v960 = vpop.f32.mrf.mxu0
    %v961 = vadd.f32 0.0, %v960
    %962 = vdwg.mxu0
    %967 = vrot.lane.b32.xlu0 %v952, 127
    %v968 = vpop.permute.xlu0 %967
    %969 = vrot.lane.b32.xlu0 %v955, 127
    %v970 = vpop.permute.xlu0 %969
    %971 = vrot.lane.b32.xlu0 %v958, 127
    %v972 = vpop.permute.xlu0 %971
    %973 = vrot.lane.b32.xlu0 %v961, 127
    %v974 = vpop.permute.xlu0 %973
    %v979 = vadd.f32 %v952, %v968
    %v980 = vadd.f32 %v955, %v970
    %v981 = vadd.f32 %v958, %v972
    %v982 = vadd.f32 %v961, %v974
    %v983 = vxor.u32 %v979, 2147483648
    %v984 = vxor.u32 %v980, 2147483648
    %v985 = vxor.u32 %v981, 2147483648
    %v986 = vxor.u32 %v982, 2147483648
    %v987 = vmul.f32 %v983, 1.442695
    %v988 = vpow.pop %v987
    %v989 = vmul.f32 %v984, 1.442695
    %v990 = vpow.pop %v989
    %v991 = vmul.f32 %v985, 1.442695
    %v992 = vpow.pop %v991
    %v993 = vmul.f32 %v986, 1.442695
    %v994 = vpow.pop %v993
    %v995 = vadd.f32 %v988, 1.0
    %v996 = vadd.f32 %v990, 1.0
    %v997 = vadd.f32 %v992, 1.0
    %v998 = vadd.f32 %v994, 1.0
    %v999 = vrcp.pop %v995
    %v1000 = vmul.f32 %v995, %v999
    %v1001 = vsub.f32 1.0, %v1000
    %v1002 = vmul.f32 %v999, %v1001
    %v1003 = vadd.f32 %v999, %v1002
    %vm1004 = vweird.f32 %v995
    %vm1005 = vweird.f32 %v999
    %vm1006 = vmor %vm1004, %vm1005
    %v1007 = vsel %vm1006, %v999, %v1003
    %v1008 = vand.u32 2147483647, %v995
    %vm1009 = vcmp.eq.f32.partialorder %v1008, 8.507059e+37
    %v1010 = vand.u32 %v995, 2147483648
    %v1011 = vor.u32 1.1754944e-38, %v1010
    %v1012 = vsel %vm1009, %v1011, %v1007
    %v1013 = vmul.f32 1.0, %v1012
    %v1014 = vrcp.pop %v996
    %v1015 = vmul.f32 %v996, %v1014
    %v1016 = vsub.f32 1.0, %v1015
    %v1017 = vmul.f32 %v1014, %v1016
    %v1018 = vadd.f32 %v1014, %v1017
    %vm1019 = vweird.f32 %v996
    %vm1020 = vweird.f32 %v1014
    %vm1021 = vmor %vm1019, %vm1020
    %v1022 = vsel %vm1021, %v1014, %v1018
    %v1023 = vand.u32 2147483647, %v996
    %vm1024 = vcmp.eq.f32.partialorder %v1023, 8.507059e+37
    %v1025 = vand.u32 %v996, 2147483648
    %v1026 = vor.u32 1.1754944e-38, %v1025
    %v1027 = vsel %vm1024, %v1026, %v1022
    %v1028 = vmul.f32 1.0, %v1027
    %v1029 = vrcp.pop %v997
    %v1030 = vmul.f32 %v997, %v1029
    %v1031 = vsub.f32 1.0, %v1030
    %v1032 = vmul.f32 %v1029, %v1031
    %v1033 = vadd.f32 %v1029, %v1032
    %vm1034 = vweird.f32 %v997
    %vm1035 = vweird.f32 %v1029
    %vm1036 = vmor %vm1034, %vm1035
    %v1037 = vsel %vm1036, %v1029, %v1033
    %v1038 = vand.u32 2147483647, %v997
    %vm1039 = vcmp.eq.f32.partialorder %v1038, 8.507059e+37
    %v1040 = vand.u32 %v997, 2147483648
    %v1041 = vor.u32 1.1754944e-38, %v1040
    %v1042 = vsel %vm1039, %v1041, %v1037
    %v1043 = vmul.f32 1.0, %v1042
    %v1044 = vrcp.pop %v998
    %v1045 = vmul.f32 %v998, %v1044
    %v1046 = vsub.f32 1.0, %v1045
    %v1047 = vmul.f32 %v1044, %v1046
    %v1048 = vadd.f32 %v1044, %v1047
    %vm1049 = vweird.f32 %v998
    %vm1050 = vweird.f32 %v1044
    %vm1051 = vmor %vm1049, %vm1050
    %v1052 = vsel %vm1051, %v1044, %v1048
    %v1053 = vand.u32 2147483647, %v998
    %vm1054 = vcmp.eq.f32.partialorder %v1053, 8.507059e+37
    %v1055 = vand.u32 %v998, 2147483648
    %v1056 = vor.u32 1.1754944e-38, %v1055
    %v1057 = vsel %vm1054, %v1056, %v1052
    %v1058 = vmul.f32 1.0, %v1057
    %1060 = vset.pattern.permute.xlu0 0
    %1061 = vperm.xlu0 %1060, %v1013
    %v1062 = vpop.permute.xlu0 %1061
    %1065 = vset.pattern.permute.xlu0 0
    %1066 = vperm.xlu0 %1065, %v1028
    %v1067 = vpop.permute.xlu0 %1066
    %1070 = vset.pattern.permute.xlu0 0
    %1071 = vperm.xlu0 %1070, %v1043
    %v1072 = vpop.permute.xlu0 %1071
    %1075 = vset.pattern.permute.xlu0 0
    %1076 = vperm.xlu0 %1075, %v1058
    %v1077 = vpop.permute.xlu0 %1076
    %v1079 = vmul.f32 %v831, %v1062
    %v1080 = vmul.f32 %v832, %v1062
    %v1081 = vmul.f32 %v833, %v1067
    %v1082 = vmul.f32 %v834, %v1067
    %v1083 = vmul.f32 %v835, %v1072
    %v1084 = vmul.f32 %v836, %v1072
    %v1085 = vmul.f32 %v837, %v1077
    %v1086 = vmul.f32 %v838, %v1077
    %v1087 = vmax.f32 %v1079, %v1081
    %v1088 = vrot.slane %v1087, 4
    %v1089 = vmax.f32 %v1087, %v1088
    %v1090 = vrot.slane %v1089, 2
    %v1091 = vmax.f32 %v1089, %v1090
    %v1092 = vrot.slane %v1091, 1
    %v1093 = vmax.f32 %v1091, %v1092
    %v1094 = vsel %vm839, %v1080, -inf
    %v1095 = vsel %vm839, %v1082, -inf
    %v1096 = vmax.f32 %v1094, %v1095
    %v1097 = vrot.slane %v1096, 4
    %v1098 = vmax.f32 %v1096, %v1097
    %v1099 = vrot.slane %v1098, 2
    %v1100 = vmax.f32 %v1098, %v1099
    %v1101 = vrot.slane %v1100, 1
    %v1102 = vmax.f32 %v1100, %v1101
    %v1103 = vadd.f32 %v1079, %v1081
    %v1104 = vrot.slane %v1103, 4
    %v1105 = vadd.f32 %v1103, %v1104
    %v1106 = vrot.slane %v1105, 2
    %v1107 = vadd.f32 %v1105, %v1106
    %v1108 = vrot.slane %v1107, 1
    %v1109 = vadd.f32 %v1107, %v1108
    %v1110 = vsel %vm839, %v1080, 0.0
    %v1111 = vsel %vm839, %v1082, 0.0
    %v1112 = vadd.f32 %v1110, %v1111
    %v1113 = vrot.slane %v1112, 4
    %v1114 = vadd.f32 %v1112, %v1113
    %v1115 = vrot.slane %v1114, 2
    %v1116 = vadd.f32 %v1114, %v1115
    %v1117 = vrot.slane %v1116, 1
    %v1118 = vadd.f32 %v1116, %v1117
    %v1119 = vrcp.pop 16.0
    %v1120 = vmul.f32 16.0, %v1119
    %v1121 = vsub.f32 1.0, %v1120
    %v1122 = vmul.f32 %v1119, %v1121
    %v1123 = vadd.f32 %v1119, %v1122
    %vm1124 = vweird.f32 %v1119
    %v1125 = vsel %vm1124, %v1119, %v1123
    %v1126 = vmul.f32 %v1109, %v1125
    %v1127 = vmul.f32 %v1118, %v1125
    %v1128 = vmax.f32 %v1083, %v1085
    %v1129 = vrot.slane %v1128, 4
    %v1130 = vmax.f32 %v1128, %v1129
    %v1131 = vrot.slane %v1130, 2
    %v1132 = vmax.f32 %v1130, %v1131
    %v1133 = vrot.slane %v1132, 1
    %v1134 = vmax.f32 %v1132, %v1133
    %v1135 = vsel %vm839, %v1084, -inf
    %v1136 = vsel %vm839, %v1086, -inf
    %v1137 = vmax.f32 %v1135, %v1136
    %v1138 = vrot.slane %v1137, 4
    %v1139 = vmax.f32 %v1137, %v1138
    %v1140 = vrot.slane %v1139, 2
    %v1141 = vmax.f32 %v1139, %v1140
    %v1142 = vrot.slane %v1141, 1
    %v1143 = vmax.f32 %v1141, %v1142
    %v1144 = vadd.f32 %v1083, %v1085
    %v1145 = vrot.slane %v1144, 4
    %v1146 = vadd.f32 %v1144, %v1145
    %v1147 = vrot.slane %v1146, 2
    %v1148 = vadd.f32 %v1146, %v1147
    %v1149 = vrot.slane %v1148, 1
    %v1150 = vadd.f32 %v1148, %v1149
    %v1151 = vsel %vm839, %v1084, 0.0
    %v1152 = vsel %vm839, %v1086, 0.0
    %v1153 = vadd.f32 %v1151, %v1152
    %v1154 = vrot.slane %v1153, 4
    %v1155 = vadd.f32 %v1153, %v1154
    %v1156 = vrot.slane %v1155, 2
    %v1157 = vadd.f32 %v1155, %v1156
    %v1158 = vrot.slane %v1157, 1
    %v1159 = vadd.f32 %v1157, %v1158
    %v1160 = vmul.f32 %v1150, %v1125
    %v1161 = vmul.f32 %v1159, %v1125
    %vm1162 = vcmask 1040384
    %v1163 = vsel %vm1162, %v1093, %v1134
    %v1164 = vsel %vm1162, %v1102, %v1143
    %v1165 = vsel %vm1162, %v1126, %v1160
    %v1166 = vsel %vm1162, %v1127, %v1161
    %v1167 = vld [vmem:[#allocation7] sm:$0xff]
    %v1168 = vld [vmem:[#allocation7 + $0x8] sm:$0xff]
    %v1169 = vld [vmem:[#allocation7 + $0x10] sm:$0xff]
    %v1170 = vld [vmem:[#allocation7 + $0x18] sm:$0xff]
    %v1171 = vld [vmem:[#allocation7 + $0x20] sm:$0xff]
    %v1172 = vld [vmem:[#allocation7 + $0x28] sm:$0xff]
    %v1173 = vld [vmem:[#allocation7 + $0x30] sm:$0xff]
    %v1174 = vld [vmem:[#allocation7 + $0x38] sm:$0xff]
    %v1175 = vld [vmem:[#allocation7 + $0x40] sm:$0xff]
    %v1176 = vld [vmem:[#allocation7 + $0x48] sm:$0xff]
    %v1177 = vld [vmem:[#allocation7 + $0x50] sm:$0xff]
    %v1178 = vld [vmem:[#allocation7 + $0x58] sm:$0xff]
    %v1179 = vld [vmem:[#allocation7 + $0x60] sm:$0xff]
    %v1180 = vld [vmem:[#allocation7 + $0x68] sm:$0xff]
    %v1181 = vld [vmem:[#allocation7 + $0x70] sm:$0xff]
    %v1182 = vld [vmem:[#allocation7 + $0x78] sm:$0xff]
    %v1183 = vld [vmem:[#allocation7 + $0x80] sm:$0xff]
    %v1184 = vld [vmem:[#allocation7 + $0x88] sm:$0xff]
    %v1185 = vld [vmem:[#allocation7 + $0x90] sm:$0xff]
    %v1186 = vld [vmem:[#allocation7 + $0x98] sm:$0xff]
    %v1187 = vld [vmem:[#allocation7 + $0xa0] sm:$0xff]
    %v1188 = vld [vmem:[#allocation7 + $0xa8] sm:$0xff]
    %v1189 = vld [vmem:[#allocation7 + $0xb0] sm:$0xff]
    %v1190 = vld [vmem:[#allocation7 + $0xb8] sm:$0xff]
    %v1191 = vld [vmem:[#allocation7 + $0xc0] sm:$0xff]
    %v1192 = vld [vmem:[#allocation7 + $0xc8] sm:$0xff]
    %v1193 = vld [vmem:[#allocation7 + $0xd0] sm:$0xff]
    %v1194 = vld [vmem:[#allocation7 + $0xd8] sm:$0xff]
    %v1195 = vld [vmem:[#allocation7 + $0xe0] sm:$0xff]
    %v1196 = vld [vmem:[#allocation7 + $0xe8] sm:$0xff]
    %v1197 = vld [vmem:[#allocation7 + $0xf0] sm:$0xff]
    %v1198 = vld [vmem:[#allocation7 + $0xf8] sm:$0xff]
    %v1199 = vld [vmem:[#allocation7 + $0x100] sm:$0xff]
    %v1200 = vld [vmem:[#allocation7 + $0x108] sm:$0xff]
    %v1201 = vld [vmem:[#allocation7 + $0x110] sm:$0xff]
    %v1202 = vld [vmem:[#allocation7 + $0x118] sm:$0xff]
    %v1203 = vld [vmem:[#allocation7 + $0x120] sm:$0xff]
    %v1204 = vld [vmem:[#allocation7 + $0x128] sm:$0xff]
    %v1205 = vld [vmem:[#allocation7 + $0x130] sm:$0xff]
    %v1206 = vld [vmem:[#allocation7 + $0x138] sm:$0xff]
    %v1207 = vld [vmem:[#allocation7 + $0x140] sm:$0xff]
    %v1208 = vld [vmem:[#allocation7 + $0x148] sm:$0xff]
    %v1209 = vld [vmem:[#allocation7 + $0x150] sm:$0xff]
    %v1210 = vld [vmem:[#allocation7 + $0x158] sm:$0xff]
    %v1211 = vld [vmem:[#allocation7 + $0x160] sm:$0xff]
    %v1212 = vld [vmem:[#allocation7 + $0x168] sm:$0xff]
    %v1213 = vld [vmem:[#allocation7 + $0x170] sm:$0xff]
    %v1214 = vld [vmem:[#allocation7 + $0x178] sm:$0xff]
    %v1215 = vld [vmem:[#allocation7 + $0x180] sm:$0xff]
    %v1216 = vld [vmem:[#allocation7 + $0x188] sm:$0xff]
    %v1217 = vld [vmem:[#allocation7 + $0x190] sm:$0xff]
    %v1218 = vld [vmem:[#allocation7 + $0x198] sm:$0xff]
    %v1219 = vld [vmem:[#allocation7 + $0x1a0] sm:$0xff]
    %v1220 = vld [vmem:[#allocation7 + $0x1a8] sm:$0xff]
    %v1221 = vld [vmem:[#allocation7 + $0x1b0] sm:$0xff]
    %v1222 = vld [vmem:[#allocation7 + $0x1b8] sm:$0xff]
    %v1223 = vld [vmem:[#allocation7 + $0x1c0] sm:$0xff]
    %v1224 = vld [vmem:[#allocation7 + $0x1c8] sm:$0xff]
    %v1225 = vld [vmem:[#allocation7 + $0x1d0] sm:$0xff]
    %v1226 = vld [vmem:[#allocation7 + $0x1d8] sm:$0xff]
    %v1227 = vld [vmem:[#allocation7 + $0x1e0] sm:$0xff]
    %v1228 = vld [vmem:[#allocation7 + $0x1e8] sm:$0xff]
    %v1229 = vld [vmem:[#allocation7 + $0x1f0] sm:$0xff]
    %v1230 = vld [vmem:[#allocation7 + $0x1f8] sm:$0xff]
    %v1231 = vld [vmem:[#allocation7 + $0x200] sm:$0xff]
    %v1232 = vld [vmem:[#allocation7 + $0x208] sm:$0xff]
    %v1233 = vld [vmem:[#allocation7 + $0x210] sm:$0xff]
    %v1234 = vld [vmem:[#allocation7 + $0x218] sm:$0xff]
    %v1235 = vld [vmem:[#allocation7 + $0x220] sm:$0xff]
    %v1236 = vld [vmem:[#allocation7 + $0x228] sm:$0xff]
    %v1237 = vld [vmem:[#allocation7 + $0x230] sm:$0xff]
    %v1238 = vld [vmem:[#allocation7 + $0x238] sm:$0xff]
    %v1239 = vld [vmem:[#allocation7 + $0x240] sm:$0xff]
    %v1240 = vld [vmem:[#allocation7 + $0x248] sm:$0xff]
    %v1241 = vld [vmem:[#allocation7 + $0x250] sm:$0xff]
    %v1242 = vld [vmem:[#allocation7 + $0x258] sm:$0xff]
    %v1243 = vld [vmem:[#allocation7 + $0x260] sm:$0xff]
    %v1244 = vld [vmem:[#allocation7 + $0x268] sm:$0xff]
    %v1245 = vld [vmem:[#allocation7 + $0x270] sm:$0xff]
    %v1246 = vld [vmem:[#allocation7 + $0x278] sm:$0xff]
    %v1247 = vld [vmem:[#allocation7 + $0x280] sm:$0xff]
    %v1248 = vld [vmem:[#allocation7 + $0x288] sm:$0xff]
    %v1249 = vld [vmem:[#allocation7 + $0x290] sm:$0xff]
    %v1250 = vld [vmem:[#allocation7 + $0x298] sm:$0xff]
    %v1251 = vld [vmem:[#allocation7 + $0x2a0] sm:$0xff]
    %v1252 = vld [vmem:[#allocation7 + $0x2a8] sm:$0xff]
    %v1253 = vld [vmem:[#allocation7 + $0x2b0] sm:$0xff]
    %v1254 = vld [vmem:[#allocation7 + $0x2b8] sm:$0xff]
    %v1255 = vld [vmem:[#allocation7 + $0x2c0] sm:$0xff]
    %v1256 = vld [vmem:[#allocation7 + $0x2c8] sm:$0xff]
    %v1257 = vld [vmem:[#allocation7 + $0x2d0] sm:$0xff]
    %v1258 = vld [vmem:[#allocation7 + $0x2d8] sm:$0xff]
    %v1259 = vld [vmem:[#allocation7 + $0x2e0] sm:$0xff]
    %v1260 = vld [vmem:[#allocation7 + $0x2e8] sm:$0xff]
    %v1261 = vld [vmem:[#allocation7 + $0x2f0] sm:$0xff]
    %v1262 = vld [vmem:[#allocation7 + $0x2f8] sm:$0xff]
    %v1263 = vld [vmem:[#allocation7 + $0x300] sm:$0xff]
    %v1264 = vld [vmem:[#allocation7 + $0x308] sm:$0xff]
    %v1265 = vld [vmem:[#allocation7 + $0x310] sm:$0xff]
    %v1266 = vld [vmem:[#allocation7 + $0x318] sm:$0xff]
    %v1267 = vld [vmem:[#allocation7 + $0x320] sm:$0xff]
    %v1268 = vld [vmem:[#allocation7 + $0x328] sm:$0xff]
    %v1269 = vld [vmem:[#allocation7 + $0x330] sm:$0xff]
    %v1270 = vld [vmem:[#allocation7 + $0x338] sm:$0xff]
    %v1271 = vld [vmem:[#allocation7 + $0x340] sm:$0xff]
    %v1272 = vld [vmem:[#allocation7 + $0x348] sm:$0xff]
    %v1273 = vld [vmem:[#allocation7 + $0x350] sm:$0xff]
    %v1274 = vld [vmem:[#allocation7 + $0x358] sm:$0xff]
    %v1275 = vld [vmem:[#allocation7 + $0x360] sm:$0xff]
    %v1276 = vld [vmem:[#allocation7 + $0x368] sm:$0xff]
    %v1277 = vld [vmem:[#allocation7 + $0x370] sm:$0xff]
    %v1278 = vld [vmem:[#allocation7 + $0x378] sm:$0xff]
    %v1280 = vsel %vm839, %v1166, 0
    %1282 = vmatpush.msra.mxu0 %v1253
    %1283 = vmatpush.msra.mxu0 %v1251
    %1284 = vmatpush.msra.mxu0 %v1249
    %1285 = vmatpush.msra.mxu0 %v1247
    %1286 = vmatpush.msra.mxu0 %v1245
    %1287 = vmatpush.msra.mxu0 %v1243
    %1288 = vmatpush.msra.mxu0 %v1241
    %1289 = vmatpush.msra.mxu0 %v1239
    %1290 = vmatpush.msra.mxu0 %v1237
    %1291 = vmatpush.msra.mxu0 %v1235
    %1292 = vmatpush.msra.mxu0 %v1233
    %1293 = vmatpush.msra.mxu0 %v1231
    %1294 = vmatpush.msra.mxu0 %v1229
    %1295 = vmatpush.msra.mxu0 %v1227
    %1296 = vmatpush.msra.mxu0 %v1225
    %1297 = vmatpush.msra.mxu0 %v1223
    %1298 = vmatmul.f32.gmra.mxu0 %v1165
    %v1299 = vpop.f32.mrf.mxu0
    %v1300 = vadd.f32 0.0, %v1299
    %1301 = vdwg.mxu0
    %1302 = vmatpush.msra.mxu0 0.0
    %1303 = vmatpush.msra.mxu0 0.0
    %1304 = vmatpush.msra.mxu0 0.0
    %1305 = vmatpush.msra.mxu0 0.0
    %1306 = vmatpush.msra.mxu0 %v1277
    %1307 = vmatpush.msra.mxu0 %v1275
    %1308 = vmatpush.msra.mxu0 %v1273
    %1309 = vmatpush.msra.mxu0 %v1271
    %1310 = vmatpush.msra.mxu0 %v1269
    %1311 = vmatpush.msra.mxu0 %v1267
    %1312 = vmatpush.msra.mxu0 %v1265
    %1313 = vmatpush.msra.mxu0 %v1263
    %1314 = vmatpush.msra.mxu0 %v1261
    %1315 = vmatpush.msra.mxu0 %v1259
    %1316 = vmatpush.msra.mxu0 %v1257
    %1317 = vmatpush.msra.mxu0 %v1255
    %1318 = vmatmul.f32.gmra.mxu0 %v1280
    %v1319 = vpop.f32.mrf.mxu0
    %v1320 = vadd.f32 %v1300, %v1319
    %1321 = vdwg.mxu0
    %1322 = vmatpush.msra.mxu0 %v1254
    %1323 = vmatpush.msra.mxu0 %v1252
    %1324 = vmatpush.msra.mxu0 %v1250
    %1325 = vmatpush.msra.mxu0 %v1248
    %1326 = vmatpush.msra.mxu0 %v1246
    %1327 = vmatpush.msra.mxu0 %v1244
    %1328 = vmatpush.msra.mxu0 %v1242
    %1329 = vmatpush.msra.mxu0 %v1240
    %1330 = vmatpush.msra.mxu0 %v1238
    %1331 = vmatpush.msra.mxu0 %v1236
    %1332 = vmatpush.msra.mxu0 %v1234
    %1333 = vmatpush.msra.mxu0 %v1232
    %1334 = vmatpush.msra.mxu0 %v1230
    %1335 = vmatpush.msra.mxu0 %v1228
    %1336 = vmatpush.msra.mxu0 %v1226
    %1337 = vmatpush.msra.mxu0 %v1224
    %1338 = vmatmul.f32.gmra.mxu0 %v1165
    %v1339 = vpop.f32.mrf.mxu0
    %v1340 = vadd.f32 0.0, %v1339
    %1341 = vdwg.mxu0
    %1342 = vmatpush.msra.mxu0 0.0
    %1343 = vmatpush.msra.mxu0 0.0
    %1344 = vmatpush.msra.mxu0 0.0
    %1345 = vmatpush.msra.mxu0 0.0
    %1346 = vmatpush.msra.mxu0 %v1278
    %1347 = vmatpush.msra.mxu0 %v1276
    %1348 = vmatpush.msra.mxu0 %v1274
    %1349 = vmatpush.msra.mxu0 %v1272
    %1350 = vmatpush.msra.mxu0 %v1270
    %1351 = vmatpush.msra.mxu0 %v1268
    %1352 = vmatpush.msra.mxu0 %v1266
    %1353 = vmatpush.msra.mxu0 %v1264
    %1354 = vmatpush.msra.mxu0 %v1262
    %1355 = vmatpush.msra.mxu0 %v1260
    %1356 = vmatpush.msra.mxu0 %v1258
    %1357 = vmatpush.msra.mxu0 %v1256
    %1358 = vmatmul.f32.gmra.mxu0 %v1280
    %v1359 = vpop.f32.mrf.mxu0
    %v1360 = vadd.f32 %v1340, %v1359
    %1361 = vdwg.mxu0
    %v1363 = vsel %vm839, %v1164, 0
    %1365 = vmatpush.msra.mxu0 %v1197
    %1366 = vmatpush.msra.mxu0 %v1195
    %1367 = vmatpush.msra.mxu0 %v1193
    %1368 = vmatpush.msra.mxu0 %v1191
    %1369 = vmatpush.msra.mxu0 %v1189
    %1370 = vmatpush.msra.mxu0 %v1187
    %1371 = vmatpush.msra.mxu0 %v1185
    %1372 = vmatpush.msra.mxu0 %v1183
    %1373 = vmatpush.msra.mxu0 %v1181
    %1374 = vmatpush.msra.mxu0 %v1179
    %1375 = vmatpush.msra.mxu0 %v1177
    %1376 = vmatpush.msra.mxu0 %v1175
    %1377 = vmatpush.msra.mxu0 %v1173
    %1378 = vmatpush.msra.mxu0 %v1171
    %1379 = vmatpush.msra.mxu0 %v1169
    %1380 = vmatpush.msra.mxu0 %v1167
    %1381 = vmatmul.f32.gmra.mxu0 %v1163
    %v1382 = vpop.f32.mrf.mxu0
    %v1383 = vadd.f32 %v1320, %v1382
    %1384 = vdwg.mxu0
    %1385 = vmatpush.msra.mxu0 0.0
    %1386 = vmatpush.msra.mxu0 0.0
    %1387 = vmatpush.msra.mxu0 0.0
    %1388 = vmatpush.msra.mxu0 0.0
    %1389 = vmatpush.msra.mxu0 %v1221
    %1390 = vmatpush.msra.mxu0 %v1219
    %1391 = vmatpush.msra.mxu0 %v1217
    %1392 = vmatpush.msra.mxu0 %v1215
    %1393 = vmatpush.msra.mxu0 %v1213
    %1394 = vmatpush.msra.mxu0 %v1211
    %1395 = vmatpush.msra.mxu0 %v1209
    %1396 = vmatpush.msra.mxu0 %v1207
    %1397 = vmatpush.msra.mxu0 %v1205
    %1398 = vmatpush.msra.mxu0 %v1203
    %1399 = vmatpush.msra.mxu0 %v1201
    %1400 = vmatpush.msra.mxu0 %v1199
    %1401 = vmatmul.f32.gmra.mxu0 %v1363
    %v1402 = vpop.f32.mrf.mxu0
    %v1403 = vadd.f32 %v1383, %v1402
    %1404 = vdwg.mxu0
    %1405 = vmatpush.msra.mxu0 %v1198
    %1406 = vmatpush.msra.mxu0 %v1196
    %1407 = vmatpush.msra.mxu0 %v1194
    %1408 = vmatpush.msra.mxu0 %v1192
    %1409 = vmatpush.msra.mxu0 %v1190
    %1410 = vmatpush.msra.mxu0 %v1188
    %1411 = vmatpush.msra.mxu0 %v1186
    %1412 = vmatpush.msra.mxu0 %v1184
    %1413 = vmatpush.msra.mxu0 %v1182
    %1414 = vmatpush.msra.mxu0 %v1180
    %1415 = vmatpush.msra.mxu0 %v1178
    %1416 = vmatpush.msra.mxu0 %v1176
    %1417 = vmatpush.msra.mxu0 %v1174
    %1418 = vmatpush.msra.mxu0 %v1172
    %1419 = vmatpush.msra.mxu0 %v1170
    %1420 = vmatpush.msra.mxu0 %v1168
    %1421 = vmatmul.f32.gmra.mxu0 %v1163
    %v1422 = vpop.f32.mrf.mxu0
    %v1423 = vadd.f32 %v1360, %v1422
    %1424 = vdwg.mxu0
    %1425 = vmatpush.msra.mxu0 0.0
    %1426 = vmatpush.msra.mxu0 0.0
    %1427 = vmatpush.msra.mxu0 0.0
    %1428 = vmatpush.msra.mxu0 0.0
    %1429 = vmatpush.msra.mxu0 %v1222
    %1430 = vmatpush.msra.mxu0 %v1220
    %1431 = vmatpush.msra.mxu0 %v1218
    %1432 = vmatpush.msra.mxu0 %v1216
    %1433 = vmatpush.msra.mxu0 %v1214
    %1434 = vmatpush.msra.mxu0 %v1212
    %1435 = vmatpush.msra.mxu0 %v1210
    %1436 = vmatpush.msra.mxu0 %v1208
    %1437 = vmatpush.msra.mxu0 %v1206
    %1438 = vmatpush.msra.mxu0 %v1204
    %1439 = vmatpush.msra.mxu0 %v1202
    %1440 = vmatpush.msra.mxu0 %v1200
    %1441 = vmatmul.f32.gmra.mxu0 %v1363
    %v1442 = vpop.f32.mrf.mxu0
    %v1443 = vadd.f32 %v1423, %v1442
    %1444 = vdwg.mxu0
    %v1445 = vld [vmem:[#allocation5 + $0xc0] sm:$0x1]
    %s1447 = vtos %v1445
    %v1448 = vstv %s1447
    %v1450 = vadd.f32 %v1403, %v1448
    %v1451 = vadd.f32 %v1443, %v1448
    %v1452 = vxor.u32 %v1450, 2147483648
    %v1453 = vxor.u32 %v1451, 2147483648
    %v1454 = vmul.f32 %v1452, 1.442695
    %v1455 = vpow.pop %v1454
    %v1456 = vmul.f32 %v1453, 1.442695
    %v1457 = vpow.pop %v1456
    %v1458 = vadd.f32 %v1455, 1.0
    %v1459 = vadd.f32 %v1457, 1.0
    %v1460 = vrcp.pop %v1458
    %v1461 = vmul.f32 %v1458, %v1460
    %v1462 = vsub.f32 1.0, %v1461
    %v1463 = vmul.f32 %v1460, %v1462
    %v1464 = vadd.f32 %v1460, %v1463
    %vm1465 = vweird.f32 %v1458
    %vm1466 = vweird.f32 %v1460
    %vm1467 = vmor %vm1465, %vm1466
    %v1468 = vsel %vm1467, %v1460, %v1464
    %v1469 = vand.u32 2147483647, %v1458
    %vm1470 = vcmp.eq.f32.partialorder %v1469, 8.507059e+37
    %v1471 = vand.u32 %v1458, 2147483648
    %v1472 = vor.u32 1.1754944e-38, %v1471
    %v1473 = vsel %vm1470, %v1472, %v1468
    %v1474 = vmul.f32 1.0, %v1473
    %v1475 = vrcp.pop %v1459
    %v1476 = vmul.f32 %v1459, %v1475
    %v1477 = vsub.f32 1.0, %v1476
    %v1478 = vmul.f32 %v1475, %v1477
    %v1479 = vadd.f32 %v1475, %v1478
    %vm1480 = vweird.f32 %v1459
    %vm1481 = vweird.f32 %v1475
    %vm1482 = vmor %vm1480, %vm1481
    %v1483 = vsel %vm1482, %v1475, %v1479
    %v1484 = vand.u32 2147483647, %v1459
    %vm1485 = vcmp.eq.f32.partialorder %v1484, 8.507059e+37
    %v1486 = vand.u32 %v1459, 2147483648
    %v1487 = vor.u32 1.1754944e-38, %v1486
    %v1488 = vsel %vm1485, %v1487, %v1483
    %v1489 = vmul.f32 1.0, %v1488
    %v1490 = vperm.slane %v1474, 0
    %v1491 = vperm.slane %v1489, 0
    %v1492 = vmul.f32 %v1079, %v1490
    %v1493 = vmul.f32 %v1080, %v1491
    %v1494 = vmul.f32 %v1081, %v1490
    %v1495 = vmul.f32 %v1082, %v1491
    %v1496 = vadd.f32 %v1492, %v831
    %v1497 = vadd.f32 %v1493, %v832
    %v1498 = vadd.f32 %v1494, %v833
    %v1499 = vadd.f32 %v1495, %v834
    %v1500 = vperm.slane %v1474, 1
    %v1501 = vperm.slane %v1489, 1
    %v1502 = vmul.f32 %v1083, %v1500
    %v1503 = vmul.f32 %v1084, %v1501
    %v1504 = vmul.f32 %v1085, %v1500
    %v1505 = vmul.f32 %v1086, %v1501
    %v1506 = vadd.f32 %v1502, %v835
    %v1507 = vadd.f32 %v1503, %v836
    %v1508 = vadd.f32 %v1504, %v837
    %v1509 = vadd.f32 %v1505, %v838
    %v1510 = vld [vmem:[#allocation8] sm:$0xff]
    %v1511 = vld [vmem:[#allocation8 + $0x8] sm:$0xff]
    %v1512 = vld [vmem:[#allocation8 + $0x10] sm:$0xff]
    %v1513 = vld [vmem:[#allocation8 + $0x18] sm:$0xff]
    %v1514 = vld [vmem:[#allocation8 + $0x20] sm:$0xff]
    %v1515 = vld [vmem:[#allocation8 + $0x28] sm:$0xff]
    %v1516 = vld [vmem:[#allocation8 + $0x30] sm:$0xff]
    %v1517 = vld [vmem:[#allocation8 + $0x38] sm:$0xff]
    %v1518 = vld [vmem:[#allocation8 + $0x40] sm:$0xff]
    %v1519 = vld [vmem:[#allocation8 + $0x48] sm:$0xff]
    %v1520 = vld [vmem:[#allocation8 + $0x50] sm:$0xff]
    %v1521 = vld [vmem:[#allocation8 + $0x58] sm:$0xff]
    %v1522 = vld [vmem:[#allocation8 + $0x60] sm:$0xff]
    %v1523 = vld [vmem:[#allocation8 + $0x68] sm:$0xff]
    %v1524 = vld [vmem:[#allocation8 + $0x70] sm:$0xff]
    %v1525 = vld [vmem:[#allocation8 + $0x78] sm:$0xff]
    %v1526 = vld [vmem:[#allocation8 + $0x80] sm:$0xff]
    %v1527 = vld [vmem:[#allocation8 + $0x88] sm:$0xff]
    %v1528 = vld [vmem:[#allocation8 + $0x90] sm:$0xff]
    %v1529 = vld [vmem:[#allocation8 + $0x98] sm:$0xff]
    %v1530 = vld [vmem:[#allocation8 + $0xa0] sm:$0xff]
    %v1531 = vld [vmem:[#allocation8 + $0xa8] sm:$0xff]
    %v1532 = vld [vmem:[#allocation8 + $0xb0] sm:$0xff]
    %v1533 = vld [vmem:[#allocation8 + $0xb8] sm:$0xff]
    %v1534 = vld [vmem:[#allocation8 + $0xc0] sm:$0xff]
    %v1535 = vld [vmem:[#allocation8 + $0xc8] sm:$0xff]
    %v1536 = vld [vmem:[#allocation8 + $0xd0] sm:$0xff]
    %v1537 = vld [vmem:[#allocation8 + $0xd8] sm:$0xff]
    %v1539 = vsel %vm839, %v1497, 0
    %v1542 = vsel %vm839, %v1499, 0
    %v1545 = vsel %vm839, %v1507, 0
    %v1548 = vsel %vm839, %v1509, 0
    %1550 = vmatpush.msra.mxu0 %v1525
    %1551 = vmatpush.msra.mxu0 %v1524
    %1552 = vmatpush.msra.mxu0 %v1523
    %1553 = vmatpush.msra.mxu0 %v1522
    %1554 = vmatpush.msra.mxu0 %v1521
    %1555 = vmatpush.msra.mxu0 %v1520
    %1556 = vmatpush.msra.mxu0 %v1519
    %1557 = vmatpush.msra.mxu0 %v1518
    %1558 = vmatpush.msra.mxu0 %v1517
    %1559 = vmatpush.msra.mxu0 %v1516
    %1560 = vmatpush.msra.mxu0 %v1515
    %1561 = vmatpush.msra.mxu0 %v1514
    %1562 = vmatpush.msra.mxu0 %v1513
    %1563 = vmatpush.msra.mxu0 %v1512
    %1564 = vmatpush.msra.mxu0 %v1511
    %1565 = vmatpush.msra.mxu0 %v1510
    %1566 = vmatmul.f32.gmra.mxu0 %v1496
    %v1567 = vpop.f32.mrf.mxu0
    %v1568 = vadd.f32 0.0, %v1567
    %1569 = vmatmul.f32.gmra.mxu0 %v1498
    %v1570 = vpop.f32.mrf.mxu0
    %v1571 = vadd.f32 0.0, %v1570
    %1572 = vmatmul.f32.gmra.mxu0 %v1506
    %v1573 = vpop.f32.mrf.mxu0
    %v1574 = vadd.f32 0.0, %v1573
    %1575 = vmatmul.f32.gmra.mxu0 %v1508
    %v1576 = vpop.f32.mrf.mxu0
    %v1577 = vadd.f32 0.0, %v1576
    %1578 = vdwg.mxu0
    %1579 = vmatpush.msra.mxu0 0.0
    %1580 = vmatpush.msra.mxu0 0.0
    %1581 = vmatpush.msra.mxu0 0.0
    %1582 = vmatpush.msra.mxu0 0.0
    %1583 = vmatpush.msra.mxu0 %v1537
    %1584 = vmatpush.msra.mxu0 %v1536
    %1585 = vmatpush.msra.mxu0 %v1535
    %1586 = vmatpush.msra.mxu0 %v1534
    %1587 = vmatpush.msra.mxu0 %v1533
    %1588 = vmatpush.msra.mxu0 %v1532
    %1589 = vmatpush.msra.mxu0 %v1531
    %1590 = vmatpush.msra.mxu0 %v1530
    %1591 = vmatpush.msra.mxu0 %v1529
    %1592 = vmatpush.msra.mxu0 %v1528
    %1593 = vmatpush.msra.mxu0 %v1527
    %1594 = vmatpush.msra.mxu0 %v1526
    %1595 = vmatmul.f32.gmra.mxu0 %v1539
    %v1596 = vpop.f32.mrf.mxu0
    %v1597 = vadd.f32 %v1568, %v1596
    %1598 = vmatmul.f32.gmra.mxu0 %v1542
    %v1599 = vpop.f32.mrf.mxu0
    %v1600 = vadd.f32 %v1571, %v1599
    %1601 = vmatmul.f32.gmra.mxu0 %v1545
    %v1602 = vpop.f32.mrf.mxu0
    %v1603 = vadd.f32 %v1574, %v1602
    %1604 = vmatmul.f32.gmra.mxu0 %v1548
    %v1605 = vpop.f32.mrf.mxu0
    %v1606 = vadd.f32 %v1577, %v1605
    %1607 = vdwg.mxu0
    %v1608 = vld [vmem:[#allocation5 + $0x28] sm:$0xff]
    %v1609 = vld [vmem:[#allocation5 + $0x30] sm:$0xff]
    %v1610 = vld [vmem:[#allocation5 + $0x38] sm:$0xff]
    %v1611 = vld [vmem:[#allocation5 + $0x40] sm:$0xff]
    %v1612 = vmul.f32 %v1597, %v1608
    %v1613 = vmul.f32 %v1600, %v1609
    %v1614 = vmul.f32 %v1603, %v1610
    %v1615 = vmul.f32 %v1606, %v1611
    %v1616 = vld [vmem:[#allocation5 + $0x48] sm:$0xff]
    %v1617 = vld [vmem:[#allocation5 + $0x50] sm:$0xff]
    %v1618 = vld [vmem:[#allocation5 + $0x58] sm:$0xff]
    %v1619 = vld [vmem:[#allocation5 + $0x60] sm:$0xff]
    %1621 = vset.pattern.permute.xlu0 0
    %1622 = vperm.xlu0 %1621, %v1616
    %v1623 = vpop.permute.xlu0 %1622
    %1626 = vset.pattern.permute.xlu0 0
    %1627 = vperm.xlu0 %1626, %v1617
    %v1628 = vpop.permute.xlu0 %1627
    %1631 = vset.pattern.permute.xlu0 0
    %1632 = vperm.xlu0 %1631, %v1618
    %v1633 = vpop.permute.xlu0 %1632
    %1636 = vset.pattern.permute.xlu0 0
    %1637 = vperm.xlu0 %1636, %v1619
    %v1638 = vpop.permute.xlu0 %1637
    %v1640 = vsub.f32 %v1612, %v1623
    %v1641 = vsub.f32 %v1613, %v1628
    %v1642 = vsub.f32 %v1614, %v1633
    %v1643 = vsub.f32 %v1615, %v1638
    %v1644 = vmax.f32 %v1640, 0.0
    %v1645 = vmax.f32 %v1641, 0.0
    %v1646 = vmax.f32 %v1642, 0.0
    %v1647 = vmax.f32 %v1643, 0.0
    %v1648 = vld [vmem:[#allocation5 + $0x68] sm:$0xff]
    %v1650 = vsel %vm197, %v1648, 0
    %1652 = vmatpush.msra.mxu0 0.0
    %1653 = vmatpush.msra.mxu0 0.0
    %1654 = vmatpush.msra.mxu0 0.0
    %1655 = vmatpush.msra.mxu0 0.0
    %1656 = vmatpush.msra.mxu0 0.0
    %1657 = vmatpush.msra.mxu0 0.0
    %1658 = vmatpush.msra.mxu0 0.0
    %1659 = vmatpush.msra.mxu0 0.0
    %1660 = vmatpush.msra.mxu0 0.0
    %1661 = vmatpush.msra.mxu0 0.0
    %1662 = vmatpush.msra.mxu0 0.0
    %1663 = vmatpush.msra.mxu0 0.0
    %1664 = vmatpush.msra.mxu0 %v1647
    %1665 = vmatpush.msra.mxu0 %v1646
    %1666 = vmatpush.msra.mxu0 %v1645
    %1667 = vmatpush.msra.mxu0 %v1644
    %1668 = vmatmul.f32.gmra.mxu0 %v1650
    %v1669 = vpop.f32.mrf.mxu0
    %v1670 = vadd.f32 0.0, %v1669
    %1671 = vdwg.mxu0
    %vm1672 = vcmask 916480
    %v1674 = vsel %vm1672, %v1670, 0
    %1676 = vmatpush.xpose.msra.mxu0 0.0
    %1677 = vmatpush.xpose.msra.mxu0 0.0
    %1678 = vmatpush.xpose.msra.mxu0 0.0
    %1679 = vmatpush.xpose.msra.mxu0 0.0
    %1680 = vmatpush.xpose.msra.mxu0 0.0
    %1681 = vmatpush.xpose.msra.mxu0 0.0
    %1682 = vmatpush.xpose.msra.mxu0 0.0
    %1683 = vmatpush.xpose.msra.mxu0 0.0
    %1684 = vmatpush.xpose.msra.mxu0 0.0
    %1685 = vmatpush.xpose.msra.mxu0 0.0
    %1686 = vmatpush.xpose.msra.mxu0 0.0
    %1687 = vmatpush.xpose.msra.mxu0 0.0
    %1688 = vmatpush.xpose.msra.mxu0 0.0
    %1689 = vmatpush.xpose.msra.mxu0 0.0
    %1690 = vmatpush.xpose.msra.mxu0 0.0
    %1691 = vmatpush.xpose.msra.mxu0 %v1674
    %1692 = vmatmul.f32.gmra.mxu0 %v1674
    %v1693 = vpop.f32.mrf.mxu0
    %v1694 = vadd.f32 0.0, %v1693
    %1695 = vdwg.mxu0
    %v1696 = vld [vmem:[#allocation5 + $0x70] sm:$0xff]
    %v1697 = vmul.f32 %v1694, %v1696
    %v1698 = vmax.f32 %v1697, 0.0
    %v1699 = vld [vmem:[#allocation5 + $0x78] sm:$0xff]
    %v1700 = vadd.f32 %v1698, %v1699
    %vm1701 = vcmask 64512
    %v1702 = vsel %vm1701, %v1700, 0.0
    %1703 = vadd.xlane.f32.xlu0 %v1702
    %v1704 = vpop.xlane.xlu0 %1703
    %vm1705 = vcmp.eq.f32.partialorder %v1704, 0.0
    %v1706 = vsel %vm1705, 1.0, 0.0
    %v1707 = vadd.f32 %v1704, %v1706
    %v1708 = vrot.slane %v1702, 4
    %v1709 = vadd.f32 %v1702, %v1708
    %v1710 = vrot.slane %v1709, 2
    %v1711 = vadd.f32 %v1709, %v1710
    %v1712 = vrot.slane %v1711, 1
    %v1713 = vadd.f32 %v1711, %v1712
    %vm1714 = vcmp.eq.f32.partialorder %v1713, 0.0
    %v1715 = vsel %vm1714, 1.0, 0.0
    %v1716 = vadd.f32 %v1713, %v1715
    %v1717 = vrsqrt.pop %v1707
    %v1718 = vmul.f32 %v1717, %v1707
    %v1719 = vmul.f32 %v1718, %v1717
    %v1720 = vmul.f32 0.5, %v1719
    %v1721 = vsub.f32 1.5, %v1720
    %v1722 = vmul.f32 %v1717, %v1721
    %vm1723 = vweird.f32 %v1707
    %vm1724 = vweird.f32 %v1717
    %vm1725 = vmor %vm1723, %vm1724
    %v1726 = vsel %vm1725, %v1717, %v1722
    %v1727 = vmul.f32 %v1726, %v1700
    %v1728 = vrsqrt.pop %v1716
    %v1729 = vmul.f32 %v1728, %v1716
    %v1730 = vmul.f32 %v1729, %v1728
    %v1731 = vmul.f32 0.5, %v1730
    %v1732 = vsub.f32 1.5, %v1731
    %v1733 = vmul.f32 %v1728, %v1732
    %vm1734 = vweird.f32 %v1716
    %vm1735 = vweird.f32 %v1728
    %vm1736 = vmor %vm1734, %vm1735
    %v1737 = vsel %vm1736, %v1728, %v1733
    %v1738 = vmul.f32 %v1727, %v1737
    %v1739 = vld [vmem:[%s7] sm:$0xff]
    %v1740 = vld [vmem:[%s7 + $0x8] sm:$0xff]
    %v1741 = vld [vmem:[%s7 + $0x10] sm:$0xff]
    %v1742 = vld [vmem:[%s7 + $0x18] sm:$0xff]
    %v1743 = vld [vmem:[%s7 + $0x20] sm:$0xff]
    %v1744 = vld [vmem:[%s7 + $0x28] sm:$0xff]
    %v1745 = vld [vmem:[%s7 + $0x30] sm:$0xff]
    %v1746 = vld [vmem:[%s7 + $0x38] sm:$0xff]
    %v1747 = vld [vmem:[%s7 + $0x40] sm:$0xff]
    %v1748 = vld [vmem:[%s7 + $0x48] sm:$0xff]
    %v1749 = vld [vmem:[%s7 + $0x50] sm:$0xff]
    %v1750 = vld [vmem:[%s7 + $0x58] sm:$0xff]
    %v1751 = vld [vmem:[%s7 + $0x60] sm:$0xff]
    %v1752 = vld [vmem:[%s7 + $0x68] sm:$0xff]
    %1753 = vmatpush.msra.mxu0 0.0
    %1754 = vmatpush.msra.mxu0 0.0
    %1755 = vmatpush.msra.mxu0 %v1752
    %1756 = vmatpush.msra.mxu0 %v1751
    %1757 = vmatpush.msra.mxu0 %v1750
    %1758 = vmatpush.msra.mxu0 %v1749
    %1759 = vmatpush.msra.mxu0 %v1748
    %1760 = vmatpush.msra.mxu0 %v1747
    %1761 = vmatpush.msra.mxu0 %v1746
    %1762 = vmatpush.msra.mxu0 %v1745
    %1763 = vmatpush.msra.mxu0 %v1744
    %1764 = vmatpush.msra.mxu0 %v1743
    %1765 = vmatpush.msra.mxu0 %v1742
    %1766 = vmatpush.msra.mxu0 %v1741
    %1767 = vmatpush.msra.mxu0 %v1740
    %1768 = vmatpush.msra.mxu0 %v1739
    %1769 = vmatmul.f32.gmra.mxu0 %v1674
    %v1770 = vpop.f32.mrf.mxu0
    %v1771 = vadd.f32 0.0, %v1770
    %1772 = vdwg.mxu0
    %v1773 = vld [vmem:[#allocation5 + $0x80] sm:$0xff]
    %1775 = vset.pattern.permute.xlu0 0
    %1776 = vperm.xlu0 %1775, %v1773
    %v1777 = vpop.permute.xlu0 %1776
    %v1779 = vmul.f32 %v1771, %v1777
    %v1780 = vld [vmem:[#allocation5 + $0x88] sm:$0xff]
    %v1781 = vadd.f32 %v1779, %v1780
    %v1783 = vsel %vm1701, %v1738, 0
    %1785 = vmatpush.msra.mxu0 0.0
    %1786 = vmatpush.msra.mxu0 0.0
    %1787 = vmatpush.msra.mxu0 0.0
    %1788 = vmatpush.msra.mxu0 0.0
    %1789 = vmatpush.msra.mxu0 0.0
    %1790 = vmatpush.msra.mxu0 0.0
    %1791 = vmatpush.msra.mxu0 0.0
    %1792 = vmatpush.msra.mxu0 0.0
    %1793 = vmatpush.msra.mxu0 0.0
    %1794 = vmatpush.msra.mxu0 0.0
    %1795 = vmatpush.msra.mxu0 0.0
    %1796 = vmatpush.msra.mxu0 0.0
    %1797 = vmatpush.msra.mxu0 0.0
    %1798 = vmatpush.msra.mxu0 0.0
    %1799 = vmatpush.msra.mxu0 0.0
    %1800 = vmatpush.msra.mxu0 %v1781
    %1801 = vmatmul.f32.gmra.mxu0 %v1783
    %v1802 = vpop.f32.mrf.mxu0
    %v1803 = vadd.f32 0.0, %v1802
    %1804 = vdwg.mxu0
    %v1805 = vld [vmem:[#allocation5 + $0x90] sm:$0xff]
    %v1806 = vld [vmem:[#allocation5 + $0x98] sm:$0xff]
    %vm1807 = vcmask 130048
    %v1809 = vsel %vm1807, %v1803, 0
    %1811 = vmatpush.msra.mxu0 0.0
    %1812 = vmatpush.msra.mxu0 0.0
    %1813 = vmatpush.msra.mxu0 0.0
    %1814 = vmatpush.msra.mxu0 0.0
    %1815 = vmatpush.msra.mxu0 0.0
    %1816 = vmatpush.msra.mxu0 0.0
    %1817 = vmatpush.msra.mxu0 0.0
    %1818 = vmatpush.msra.mxu0 0.0
    %1819 = vmatpush.msra.mxu0 0.0
    %1820 = vmatpush.msra.mxu0 0.0
    %1821 = vmatpush.msra.mxu0 0.0
    %1822 = vmatpush.msra.mxu0 0.0
    %1823 = vmatpush.msra.mxu0 0.0
    %1824 = vmatpush.msra.mxu0 0.0
    %1825 = vmatpush.msra.mxu0 %v1806
    %1826 = vmatpush.msra.mxu0 %v1805
    %1827 = vmatmul.f32.gmra.mxu0 %v1809
    %v1828 = vpop.f32.mrf.mxu0
    %v1829 = vadd.f32 0.0, %v1828
    %1830 = vdwg.mxu0
    %v1831 = vld [vmem:[#allocation5 + $0xa0] sm:$0xff]
    %v1832 = vmul.f32 %v1829, %v1831
    %v1833 = vld [vmem:[#allocation5 + $0xa8] sm:$0x3]
    %v1835 = vsel %vm1701, %v1833, 0
    %1837 = vmatpush.msra.mxu0 0.0
    %1838 = vmatpush.msra.mxu0 0.0
    %1839 = vmatpush.msra.mxu0 0.0
    %1840 = vmatpush.msra.mxu0 0.0
    %1841 = vmatpush.msra.mxu0 0.0
    %1842 = vmatpush.msra.mxu0 0.0
    %1843 = vmatpush.msra.mxu0 0.0
    %1844 = vmatpush.msra.mxu0 0.0
    %1845 = vmatpush.msra.mxu0 0.0
    %1846 = vmatpush.msra.mxu0 0.0
    %1847 = vmatpush.msra.mxu0 0.0
    %1848 = vmatpush.msra.mxu0 0.0
    %1849 = vmatpush.msra.mxu0 0.0
    %1850 = vmatpush.msra.mxu0 0.0
    %1851 = vmatpush.msra.mxu0 0.0
    %1852 = vmatpush.msra.mxu0 %v1832
    %1853 = vmatmul.f32.gmra.mxu0 %v1835
    %v1854 = vpop.f32.mrf.mxu0
    %v1855 = vadd.f32 0.0, %v1854
    %1856 = vdwg.mxu0
    %v1857 = vld [vmem:[#allocation5 + $0xb0] sm:$0xff]
    %v1858 = vld [vmem:[#allocation5 + $0xb8] sm:$0x1]
    %v1859 = vperm.slane %v1858, 0
    %v1861 = vsel %vm1701, %v1855, 0
    %1863 = vmatpush.msra.mxu0 0.0
    %1864 = vmatpush.msra.mxu0 0.0
    %1865 = vmatpush.msra.mxu0 0.0
    %1866 = vmatpush.msra.mxu0 0.0
    %1867 = vmatpush.msra.mxu0 0.0
    %1868 = vmatpush.msra.mxu0 0.0
    %1869 = vmatpush.msra.mxu0 0.0
    %1870 = vmatpush.msra.mxu0 0.0
    %1871 = vmatpush.msra.mxu0 0.0
    %1872 = vmatpush.msra.mxu0 0.0
    %1873 = vmatpush.msra.mxu0 0.0
    %1874 = vmatpush.msra.mxu0 0.0
    %1875 = vmatpush.msra.mxu0 0.0
    %1876 = vmatpush.msra.mxu0 0.0
    %1877 = vmatpush.msra.mxu0 0.0
    %1878 = vmatpush.msra.mxu0 %v1857
    %1879 = vmatmul.f32.gmra.mxu0 %v1861
    %v1880 = vpop.f32.mrf.mxu0
    %v1881 = vadd.f32 %v1859, %v1880
    %1882 = vdwg.mxu0
    %vm1883 = vcmask 9216
    %1884 = vst.msk [vmem:[#allocation10] sm:$0x3] %vm1883, %v1881
    // Predicated region
    $region50: #{forward.1} parent=1 // pred_check
      _
    $region51: #{forward.1} parent=1 // pred_check_branch
      %1886 = sbr.rel (0) target = $region53
    $region52: #{forward.1} parent=1 // pred_region
      %1888 = vsyncadd [#allocation4], 0
      %s1890 = sshll.u32 [#allocation10], 4
      %s1891 = int_to_ptr.vmem [resolvable:$true] %s1890
      %s1892 = sshll.u32 %s8, 4
      %s1893 = int_to_ptr.hbm [resolvable:$true] %s1892
      %1895 = dma.vmem_to_hbm [thread:$0]  %s1891, 32, %s1893, [#allocation4]
    $region53: #{forward.1} parent=1 // pred_fallthru
      _
    // Predicated region
    $region54: #{forward.1} parent=1 // pred_check
      _
    $region55: #{forward.1} parent=1 // pred_check_branch
      %1897 = sbr.rel (0) target = $region57
    $region56: #{forward.1} parent=1 // pred_region
      %1899 = dma.done [#allocation4], 32
    $region57: #{forward.1} parent=1 // pred_fallthru
      _
    %1900 = vsyncpa [#allocation3], 1
    %1901 = vsyncpa [#allocation6], 1
    %1902 = vsyncpa [#allocation9], 1
    %1903 = vsyncpa [#allocation4], 1

</llo_original>
